<compile_context>
chip_gen: v7x
topology: tpu7x:2x2x1
jax: 0.10.0
libtpu: 0.0.40
codegen_flags: <defaults>
</compile_context>

<pallas_src>
import jax
import jax.numpy as jnp
from jax.experimental import pallas as pl
from jax.experimental.pallas import tpu as pltpu


def _nullable_linear_kernel(tile_flags_ref, data_blk_ref, data_ref, w_ref,
                            b_ref, mask_ref, out_ref):
    i = pl.program_id(0)

    @pl.when(tile_flags_ref[i] != 0)
    def _compute():
        # (tile_n, D) @ (D, D_OUT) on the MXU, f32 accumulate.
        y = jnp.dot(data_ref[...], w_ref[...],
                    preferred_element_type=jnp.float32)
        y = y + b_ref[...]                                  # (1, D_OUT) broadcast
        # Exact-zero fill for invalid rows (select, not multiply -> no NaN leak).
        out_ref[...] = jnp.where(mask_ref[...] != 0, y,
                                 jnp.zeros_like(y)).astype(out_ref.dtype)

    @pl.when(tile_flags_ref[i] == 0)
    def _fill():
        # Fully-invalid tile: fillmethod == zeros. MXU skipped; the data DMA for
        # this tile was already elided by the deduplicating index_map.
        out_ref[...] = jnp.zeros_like(out_ref)


def nullable_linear(data, indicator, weight, bias, *, tile_n=512,
                    compute_dtype=None):
    """data: (N, D), indicator: (N,) int/bool, weight: (D_OUT, D), bias: (D_OUT,).

    compute_dtype: optional narrower I/O dtype (e.g. jnp.bfloat16) for data and
    weight; accumulation stays f32 and the output keeps data.dtype.
    """
    n, d = data.shape
    d_out = weight.shape[0]
    out_dtype = data.dtype

    tile_n = int(min(tile_n, n))            # tiny N -> single grid step
    num_tiles = pl.cdiv(n, tile_n)

    in_dtype = compute_dtype if compute_dtype is not None else data.dtype
    data_c = data.astype(in_dtype)
    w_t = weight.T.astype(in_dtype)         # (D, D_OUT): MXU-friendly, one-time transpose
    bias2d = bias.reshape(1, d_out).astype(jnp.float32)

    # Per-row 0/1 mask (N, 1) -> one select per tile in the kernel epilogue.
    mask = (indicator.reshape(n, 1) != 0).astype(jnp.int32)

    # Per-tile "any valid row" flags (scalar-prefetched into SMEM).
    valid = indicator.reshape(-1) != 0
    pad = num_tiles * tile_n - n
    if pad:
        valid = jnp.concatenate([valid, jnp.zeros((pad,), valid.dtype)])
    tile_valid = valid.reshape(num_tiles, tile_n).any(axis=1)
    tile_flags = tile_valid.astype(jnp.int32)

    # Data-block dedup index: invalid tiles re-point at the last fetched block,
    # so the BlockSpec pipeline sees an unchanged block index and skips the DMA.
    idx = jnp.arange(num_tiles, dtype=jnp.int32)
    data_blk = jnp.maximum(
        jax.lax.cummax(jnp.where(tile_valid, idx, jnp.int32(-1))), 0
    ).astype(jnp.int32)

    in_itemsize = jnp.dtype(in_dtype).itemsize
    out_itemsize = jnp.dtype(out_dtype).itemsize
    cost = pl.CostEstimate(
        flops=2 * n * d * d_out,
        transcendentals=0,
        bytes_accessed=(n * d + d * d_out) * in_itemsize
        + d_out * 4 + n * 4 + n * d_out * out_itemsize,
    )

    grid_spec = pltpu.PrefetchScalarGridSpec(
        num_scalar_prefetch=2,
        grid=(num_tiles,),
        in_specs=[
            pl.BlockSpec((tile_n, d), lambda i, flags, blk: (blk[i], 0)),  # data (deduped)
            pl.BlockSpec((d, d_out), lambda i, flags, blk: (0, 0)),        # resident W^T
            pl.BlockSpec((1, d_out), lambda i, flags, blk: (0, 0)),        # resident b
            pl.BlockSpec((tile_n, 1), lambda i, flags, blk: (i, 0)),       # row mask
        ],
        out_specs=pl.BlockSpec((tile_n, d_out), lambda i, flags, blk: (i, 0)),
    )

    return pl.pallas_call(
        _nullable_linear_kernel,
        out_shape=jax.ShapeDtypeStruct((n, d_out), out_dtype),
        grid_spec=grid_spec,
        compiler_params=pltpu.CompilerParams(
            dimension_semantics=("parallel",),
            vmem_limit_bytes=32 * 1024 * 1024,
        ),
        cost_estimate=cost,
    )(tile_flags, data_blk, data_c, w_t, bias2d, mask)


def _reference(data, indicator, weight, bias):
    # Pure-JAX reference of the Nullable-with-zeros-fill semantics.
    full = data @ weight.T + bias
    m = indicator.reshape(-1, 1) != 0
    return jnp.where(m, full, jnp.zeros_like(full)).astype(data.dtype)


if __name__ == "__main__":
    key = jax.random.PRNGKey(0)
    k_data, k_w, k_b, k_ind = jax.random.split(key, 4)

    # Lane/sublane-friendly sizes: D_OUT multiple of 128.
    N, D, D_OUT = 512, 256, 128
    data = jax.random.normal(k_data, (N, D), dtype=jnp.float32)
    # Deterministic "parameters" of the inner Linear module.
    weight = jax.random.normal(k_w, (D_OUT, D), dtype=jnp.float32) / jnp.sqrt(D)
    bias = jax.random.normal(k_b, (D_OUT,), dtype=jnp.float32) * 0.1
    indicator = (jax.random.uniform(k_ind, (N,)) > 0.5).astype(jnp.int32)

    ref = _reference(data, indicator, weight, bias)

    # 1) Single grid step (tile_n >= N): the "tiny N" path.
    out = jax.block_until_ready(nullable_linear(data, indicator, weight, bias))
    assert out.shape == (N, D_OUT)
    assert jnp.allclose(out, ref, atol=1e-5, rtol=1e-5)

    # 2) Multi-tile grid with fully-invalid tiles: exercises the zero-fill fast
    #    path and the data-DMA dedup for invalid tiles.
    ind_block = indicator.at[128:384].set(0)      # tiles 1,2 fully invalid at tile_n=128
    out_blk = jax.block_until_ready(
        nullable_linear(data, ind_block, weight, bias, tile_n=128))
    assert jnp.allclose(out_blk, _reference(data, ind_block, weight, bias),
                        atol=1e-5, rtol=1e-5)

    # 3) "No valid rows" branch: output must be all fill (zeros).
    out_empty = jax.block_until_ready(
        nullable_linear(data, jnp.zeros((N,), jnp.int32), weight, bias, tile_n=128))
    assert jnp.allclose(out_empty, jnp.zeros((N, D_OUT), jnp.float32))

    # 4) Ragged N (N % tile_n != 0 and N % 8 != 0): partial last tile.
    Nr = 300
    out_rag = jax.block_until_ready(
        nullable_linear(data[:Nr], indicator[:Nr], weight, bias, tile_n=128))
    assert out_rag.shape == (Nr, D_OUT)
    assert jnp.allclose(out_rag, _reference(data[:Nr], indicator[:Nr], weight, bias),
                        atol=1e-5, rtol=1e-5)

    # 5) NaN in an invalid row must not leak into the zero fill (where-select).
    data_nan = data.at[1].set(jnp.nan)
    ind_nan = indicator.at[1].set(0)
    out_nan = jax.block_until_ready(
        nullable_linear(data_nan, ind_nan, weight, bias, tile_n=128))
    assert bool(jnp.all(jnp.isfinite(out_nan)))

    # 6) Optional bf16 I/O path (mem-bound win on v6e/v7x); invalid rows stay
    #    exact zeros, valid rows close to the f32 reference.
    out_bf = jax.block_until_ready(
        nullable_linear(data, indicator, weight, bias, tile_n=128,
                        compute_dtype=jnp.bfloat16))
    assert out_bf.dtype == data.dtype
    assert bool(jnp.all(jnp.where(indicator.reshape(-1, 1) != 0, 0.0, out_bf) == 0.0))
    assert jnp.allclose(out_bf, ref, atol=0.1, rtol=0.1)

    print("KERNEL_OK")
</pallas_src>

<mosaic_0001>
module attributes {stable_mosaic.version = 11 : i64} {
  func.func @_nullable_linear_kernel(%arg0: i32, %arg1: memref<1xi32, #tpu.memory_space<smem>>, %arg2: memref<1xi32, #tpu.memory_space<smem>>, %arg3: memref<512x256xf32, #tpu.memory_space<vmem>>, %arg4: memref<256x128xf32, #tpu.memory_space<vmem>>, %arg5: memref<1x128xf32, #tpu.memory_space<vmem>>, %arg6: memref<512x1xi32, #tpu.memory_space<vmem>>, %arg7: memref<512x128xf32, #tpu.memory_space<vmem>>) attributes {dimension_semantics = [#tpu.dimension_semantics<parallel>], iteration_bounds = array<i64: 1>, scalar_prefetch = 2 : i64, scratch_operands = 0 : i64, tpu.core_type = #tpu.core_type<tc>, window_params = [{transform_indices = @transform_0, window_bounds = array<i64: 512, 256>}, {pipeline_mode = #tpu.pipeline_mode<synchronous>, transform_indices = @transform_1, window_bounds = array<i64: 256, 128>}, {pipeline_mode = #tpu.pipeline_mode<synchronous>, transform_indices = @transform_2, window_bounds = array<i64: 1, 128>}, {transform_indices = @transform_3, window_bounds = array<i64: 512, 1>}, {transform_indices = @transform_4, window_bounds = array<i64: 512, 128>}]} {
    %0 = arith.index_cast %arg0 : i32 to index
    %1 = memref.load %arg1[%0] : memref<1xi32, #tpu.memory_space<smem>>
    %c0_i32 = arith.constant 0 : i32
    %2 = arith.cmpi ne, %1, %c0_i32 : i32
    %3 = arith.extui %2 : i1 to i32
    %c0_i32_0 = arith.constant 0 : i32
    %4 = arith.cmpi ne, %3, %c0_i32_0 : i32
    scf.if %4 {
      %c0 = arith.constant 0 : index
      %c0_3 = arith.constant 0 : index
      %10 = vector.load %arg3[%c0, %c0_3] : memref<512x256xf32, #tpu.memory_space<vmem>>, vector<512x256xf32>
      %c0_4 = arith.constant 0 : index
      %c0_5 = arith.constant 0 : index
      %11 = vector.load %arg4[%c0_4, %c0_5] : memref<256x128xf32, #tpu.memory_space<vmem>>, vector<256x128xf32>
      %cst = arith.constant dense<0.000000e+00> : vector<512x128xf32>
      %12 = tpu.matmul %10, %11, %cst {dimension_numbers = #tpu.dot_dimension_numbers<[1], [0], [0], [1], [0, 0, 1, 1], [], []>} : vector<512x256xf32>, vector<256x128xf32>, vector<512x128xf32> -> vector<512x128xf32>
      %c0_6 = arith.constant 0 : index
      %c0_7 = arith.constant 0 : index
      %13 = vector.load %arg5[%c0_6, %c0_7] : memref<1x128xf32, #tpu.memory_space<vmem>>, vector<1x128xf32>
      %14 = vector.broadcast %13 : vector<1x128xf32> to vector<512x128xf32>
      %15 = arith.addf %12, %14 : vector<512x128xf32>
      %c0_8 = arith.constant 0 : index
      %c0_9 = arith.constant 0 : index
      %16 = vector.load %arg6[%c0_8, %c0_9] : memref<512x1xi32, #tpu.memory_space<vmem>>, vector<512x1xi32>
      %c0_i32_10 = arith.constant 0 : i32
      %17 = vector.broadcast %c0_i32_10 : i32 to vector<512x1xi32>
      %18 = arith.cmpi ne, %16, %17 : vector<512x1xi32>
      %cst_11 = arith.constant 0.000000e+00 : f32
      %19 = vector.broadcast %cst_11 : f32 to vector<512x128xf32>
      %20 = vector.shape_cast %18 : vector<512x1xi1> to vector<512x1xi1>
      %21 = vector.broadcast %20 : vector<512x1xi1> to vector<512x128xi1>
      %22 = arith.select %21, %15, %19 : vector<512x128xi1>, vector<512x128xf32>
      %c0_12 = arith.constant 0 : index
      %c0_13 = arith.constant 0 : index
      %23 = vector.load %arg7[%c0_12, %c0_13] : memref<512x128xf32, #tpu.memory_space<vmem>>, vector<512x128xf32>
      tpu.vector_store %arg7[%c0_12, %c0_13], %22 {strides = array<i32>} : memref<512x128xf32, #tpu.memory_space<vmem>>, vector<512x128xf32>,
    } else {
    }
    %5 = arith.index_cast %arg0 : i32 to index
    %6 = memref.load %arg1[%5] : memref<1xi32, #tpu.memory_space<smem>>
    %c0_i32_1 = arith.constant 0 : i32
    %7 = arith.cmpi eq, %6, %c0_i32_1 : i32
    %8 = arith.extui %7 : i1 to i32
    %c0_i32_2 = arith.constant 0 : i32
    %9 = arith.cmpi ne, %8, %c0_i32_2 : i32
    scf.if %9 {
      %cst = arith.constant 0.000000e+00 : f32
      %10 = vector.broadcast %cst : f32 to vector<512x128xf32>
      %c0 = arith.constant 0 : index
      %c0_3 = arith.constant 0 : index
      %11 = vector.load %arg7[%c0, %c0_3] : memref<512x128xf32, #tpu.memory_space<vmem>>, vector<512x128xf32>
      tpu.vector_store %arg7[%c0, %c0_3], %10 {strides = array<i32>} : memref<512x128xf32, #tpu.memory_space<vmem>>, vector<512x128xf32>,
    } else {
    }
    return
  }
  func.func @transform_0(%arg0: i32, %arg1: memref<1xi32, #tpu.memory_space<smem>>, %arg2: memref<1xi32, #tpu.memory_space<smem>>) -> (i32, i32) {
    %0 = arith.index_cast %arg0 : i32 to index
    %1 = memref.load %arg2[%0] : memref<1xi32, #tpu.memory_space<smem>>
    %c0_i32 = arith.constant 0 : i32
    %c0_i32_0 = arith.constant 0 : i32
    return %1, %c0_i32 : i32, i32
  }
  func.func @transform_1(%arg0: i32, %arg1: memref<1xi32, #tpu.memory_space<smem>>, %arg2: memref<1xi32, #tpu.memory_space<smem>>) -> (i32, i32) {
    %c0_i32 = arith.constant 0 : i32
    %c0_i32_0 = arith.constant 0 : i32
    %c0_i32_1 = arith.constant 0 : i32
    return %c0_i32, %c0_i32_0 : i32, i32
  }
  func.func @transform_2(%arg0: i32, %arg1: memref<1xi32, #tpu.memory_space<smem>>, %arg2: memref<1xi32, #tpu.memory_space<smem>>) -> (i32, i32) {
    %c0_i32 = arith.constant 0 : i32
    %c0_i32_0 = arith.constant 0 : i32
    %c0_i32_1 = arith.constant 0 : i32
    return %c0_i32, %c0_i32_0 : i32, i32
  }
  func.func @transform_3(%arg0: i32, %arg1: memref<1xi32, #tpu.memory_space<smem>>, %arg2: memref<1xi32, #tpu.memory_space<smem>>) -> (i32, i32) {
    %c0_i32 = arith.constant 0 : i32
    %c0_i32_0 = arith.constant 0 : i32
    return %arg0, %c0_i32 : i32, i32
  }
  func.func @transform_4(%arg0: i32, %arg1: memref<1xi32, #tpu.memory_space<smem>>, %arg2: memref<1xi32, #tpu.memory_space<smem>>) -> (i32, i32) {
    %c0_i32 = arith.constant 0 : i32
    %c0_i32_0 = arith.constant 0 : i32
    return %arg0, %c0_i32 : i32, i32
  }
}

</mosaic_0001>

<llo_original>
// kernel: tpu_custom_call.1
$region0: #{tpu_custom_call.1}
  #allocation0 [shape = 'u32[]', space=smem, size = 0x4, offset = 0x4, fixed_abs, tag = 'smem constant byte address 0x4 - core index']
  #allocation1 [shape = 'u32[144,128]{1,0:T(1,128)}', space=vmem, size = 0x12000, scoped, tag = 'internal scratch']
  #allocation2 [shape = 's32[1]{0}', space=sflag, size = 0x4, scoped, tag = 'scoped memory for tpu_custom_call.1']
  #allocation3 [shape = 's32[1]{0:T(128)S(6)}', space=smem, size = 0x200, scoped, tag = 'prefetched SMEM operand 0']
  #allocation4 [shape = 's32[1]{0:T(128)S(6)}', space=smem, size = 0x200, scoped, tag = 'prefetched SMEM operand 1']
  %s0 = inlined_call_operand.<no memory space> [shape: s32[1], index: 0, kind: input, shape index: {}]
  %s1 = inlined_call_operand.<no memory space> [shape: s32[1], index: 1, kind: input, shape index: {}]
  %s2 = inlined_call_operand.hbm [shape: f32[512,256], index: 2, kind: input, shape index: {}]
  %s3 = inlined_call_operand.vmem [shape: f32[256,128], index: 3, kind: input, shape index: {}]
  %s4 = inlined_call_operand.vmem [shape: f32[1,128], index: 4, kind: input, shape index: {}]
  %s5 = inlined_call_operand.vmem [shape: s32[512,1], index: 5, kind: input, shape index: {}]
  %s6 = inlined_call_operand.hbm [shape: f32[512,128], index: 6, kind: output, shape index: {}]
  %s7 = sld [smem:[#allocation0]]
  $region38: #{tpu_custom_call.1} parent=0
    _
  %s9 = ssub.s32 1, %s7
  %s10 = scalar_select 0, %s9, %s7
  %11 = sst [smem:[#allocation3]] %s0
  %12 = sst [smem:[#allocation4]] %s1
  $region1: #{tpu_custom_call.1} parent=0
    #allocation5 [shape = 'u8[524288]{0}', space=vmem, size = 0x80000, scoped, tag = 'input window, operand 2, single buffered']
    #allocation6 [shape = 's32[1]{0}', space=sflag, size = 0x4, scoped, tag = 'scoped memory for tpu_custom_call.1']
    #allocation7 [shape = 's32[1]{0}', space=sflag, size = 0x4, scoped, tag = 'scoped memory for tpu_custom_call.1']
    #allocation8 [shape = 'u8[262144]{0}', space=vmem, size = 0x40000, scoped, tag = 'output window, operand 0, single buffered']
    %13 = vsyncpa [#allocation6], 0
    %14 = vsyncpa [#allocation7], 0
    // Predicated region
    $region2: #{tpu_custom_call.1} parent=1 // pred_check
      _
    $region3: #{tpu_custom_call.1} parent=1 // pred_check_branch
      %16 = sbr.rel (0) target = $region5
    $region4: #{tpu_custom_call.1} parent=1 // pred_region
      %s17 = sld [smem:[#allocation4]]
      %s18 = smul.u32 64, %s17
      %s20 = ssub.s32 16384, 16384
      %21 = vsyncadd [#allocation6], %s20
      %s22 = smul.addr %s18, 2
      %s23 = smul.addr %s22, 128
      %s24 = scalar_lea.hbm %s2, %s23
      %s25 = sshll.u32 [#allocation5], 4
      %s26 = int_to_ptr.vmem [resolvable:$true] %s25
      %31 = dma.hbm_to_vmem [thread:$0]  %s24, 16384, %s26, [#allocation6], 256, 256, 16
    $region5: #{tpu_custom_call.1} parent=1 // pred_fallthru
      _
    // Predicated region
    $region6: #{tpu_custom_call.1} parent=1 // pred_check
      _
    $region7: #{tpu_custom_call.1} parent=1 // pred_check_branch
      %33 = sbr.rel (0) target = $region9
    $region8: #{tpu_custom_call.1} parent=1 // pred_region
      _
    $region9: #{tpu_custom_call.1} parent=1 // pred_fallthru
      _
    // Predicated region
    $region10: #{tpu_custom_call.1} parent=1 // pred_check
      _
    $region11: #{tpu_custom_call.1} parent=1 // pred_check_branch
      %35 = sbr.rel (0) target = $region13
    $region12: #{tpu_custom_call.1} parent=1 // pred_region
      _
    $region13: #{tpu_custom_call.1} parent=1 // pred_fallthru
      _
    // Predicated region
    $region14: #{tpu_custom_call.1} parent=1 // pred_check
      _
    $region15: #{tpu_custom_call.1} parent=1 // pred_check_branch
      %37 = sbr.rel (0) target = $region17
    $region16: #{tpu_custom_call.1} parent=1 // pred_region
      _
    $region17: #{tpu_custom_call.1} parent=1 // pred_fallthru
      _
    // Predicated region
    $region18: #{tpu_custom_call.1} parent=1 // pred_check
      _
    $region19: #{tpu_custom_call.1} parent=1 // pred_check_branch
      %39 = sbr.rel (0) target = $region21
    $region20: #{tpu_custom_call.1} parent=1 // pred_region
      %40 = dma.done [#allocation6], 16384
    $region21: #{tpu_custom_call.1} parent=1 // pred_fallthru
      _
    %s41 = sld [smem:[#allocation4]]
    %s42 = smul.u32 64, %s41
    %s43 = sld [smem:[#allocation3]]
    %p44 = scmp.ne.s32.totalorder %s43, 0
    // Predicated region
    $region22: #{tpu_custom_call.1} parent=1 // pred_check
      %p45 = pneg %p44
    $region23: #{tpu_custom_call.1} parent=1 // pred_check_branch
      %47 = sbr.rel (%p45) target = $region25
    $region24: #{tpu_custom_call.1} parent=1 // pred_region
      %v48 = vld [vmem:[#allocation5] sm:$0xff]
      %v49 = vld [vmem:[#allocation5 + $0x8] sm:$0xff]
      %v50 = vld [vmem:[#allocation5 + $0x10] sm:$0xff]
      %v51 = vld [vmem:[#allocation5 + $0x18] sm:$0xff]
      %v52 = vld [vmem:[#allocation5 + $0x20] sm:$0xff]
      %v53 = vld [vmem:[#allocation5 + $0x28] sm:$0xff]
      %v54 = vld [vmem:[#allocation5 + $0x30] sm:$0xff]
      %v55 = vld [vmem:[#allocation5 + $0x38] sm:$0xff]
      %v56 = vld [vmem:[#allocation5 + $0x40] sm:$0xff]
      %v57 = vld [vmem:[#allocation5 + $0x48] sm:$0xff]
      %v58 = vld [vmem:[#allocation5 + $0x50] sm:$0xff]
      %v59 = vld [vmem:[#allocation5 + $0x58] sm:$0xff]
      %v60 = vld [vmem:[#allocation5 + $0x60] sm:$0xff]
      %v61 = vld [vmem:[#allocation5 + $0x68] sm:$0xff]
      %v62 = vld [vmem:[#allocation5 + $0x70] sm:$0xff]
      %v63 = vld [vmem:[#allocation5 + $0x78] sm:$0xff]
      %v64 = vld [vmem:[#allocation5 + $0x80] sm:$0xff]
      %v65 = vld [vmem:[#allocation5 + $0x88] sm:$0xff]
      %v66 = vld [vmem:[#allocation5 + $0x90] sm:$0xff]
      %v67 = vld [vmem:[#allocation5 + $0x98] sm:$0xff]
      %v68 = vld [vmem:[#allocation5 + $0xa0] sm:$0xff]
      %v69 = vld [vmem:[#allocation5 + $0xa8] sm:$0xff]
      %v70 = vld [vmem:[#allocation5 + $0xb0] sm:$0xff]
      %v71 = vld [vmem:[#allocation5 + $0xb8] sm:$0xff]
      %v72 = vld [vmem:[#allocation5 + $0xc0] sm:$0xff]
      %v73 = vld [vmem:[#allocation5 + $0xc8] sm:$0xff]
      %v74 = vld [vmem:[#allocation5 + $0xd0] sm:$0xff]
      %v75 = vld [vmem:[#allocation5 + $0xd8] sm:$0xff]
      %v76 = vld [vmem:[#allocation5 + $0xe0] sm:$0xff]
      %v77 = vld [vmem:[#allocation5 + $0xe8] sm:$0xff]
      %v78 = vld [vmem:[#allocation5 + $0xf0] sm:$0xff]
      %v79 = vld [vmem:[#allocation5 + $0xf8] sm:$0xff]
      %v80 = vld [vmem:[#allocation5 + $0x100] sm:$0xff]
      %v81 = vld [vmem:[#allocation5 + $0x108] sm:$0xff]
      %v82 = vld [vmem:[#allocation5 + $0x110] sm:$0xff]
      %v83 = vld [vmem:[#allocation5 + $0x118] sm:$0xff]
      %v84 = vld [vmem:[#allocation5 + $0x120] sm:$0xff]
      %v85 = vld [vmem:[#allocation5 + $0x128] sm:$0xff]
      %v86 = vld [vmem:[#allocation5 + $0x130] sm:$0xff]
      %v87 = vld [vmem:[#allocation5 + $0x138] sm:$0xff]
      %v88 = vld [vmem:[#allocation5 + $0x140] sm:$0xff]
      %v89 = vld [vmem:[#allocation5 + $0x148] sm:$0xff]
      %v90 = vld [vmem:[#allocation5 + $0x150] sm:$0xff]
      %v91 = vld [vmem:[#allocation5 + $0x158] sm:$0xff]
      %v92 = vld [vmem:[#allocation5 + $0x160] sm:$0xff]
      %v93 = vld [vmem:[#allocation5 + $0x168] sm:$0xff]
      %v94 = vld [vmem:[#allocation5 + $0x170] sm:$0xff]
      %v95 = vld [vmem:[#allocation5 + $0x178] sm:$0xff]
      %v96 = vld [vmem:[#allocation5 + $0x180] sm:$0xff]
      %v97 = vld [vmem:[#allocation5 + $0x188] sm:$0xff]
      %v98 = vld [vmem:[#allocation5 + $0x190] sm:$0xff]
      %v99 = vld [vmem:[#allocation5 + $0x198] sm:$0xff]
      %v100 = vld [vmem:[#allocation5 + $0x1a0] sm:$0xff]
      %v101 = vld [vmem:[#allocation5 + $0x1a8] sm:$0xff]
      %v102 = vld [vmem:[#allocation5 + $0x1b0] sm:$0xff]
      %v103 = vld [vmem:[#allocation5 + $0x1b8] sm:$0xff]
      %v104 = vld [vmem:[#allocation5 + $0x1c0] sm:$0xff]
      %v105 = vld [vmem:[#allocation5 + $0x1c8] sm:$0xff]
      %v106 = vld [vmem:[#allocation5 + $0x1d0] sm:$0xff]
      %v107 = vld [vmem:[#allocation5 + $0x1d8] sm:$0xff]
      %v108 = vld [vmem:[#allocation5 + $0x1e0] sm:$0xff]
      %v109 = vld [vmem:[#allocation5 + $0x1e8] sm:$0xff]
      %v110 = vld [vmem:[#allocation5 + $0x1f0] sm:$0xff]
      %v111 = vld [vmem:[#allocation5 + $0x1f8] sm:$0xff]
      %v112 = vld [vmem:[#allocation5 + $0x200] sm:$0xff]
      %v113 = vld [vmem:[#allocation5 + $0x208] sm:$0xff]
      %v114 = vld [vmem:[#allocation5 + $0x210] sm:$0xff]
      %v115 = vld [vmem:[#allocation5 + $0x218] sm:$0xff]
      %v116 = vld [vmem:[#allocation5 + $0x220] sm:$0xff]
      %v117 = vld [vmem:[#allocation5 + $0x228] sm:$0xff]
      %v118 = vld [vmem:[#allocation5 + $0x230] sm:$0xff]
      %v119 = vld [vmem:[#allocation5 + $0x238] sm:$0xff]
      %v120 = vld [vmem:[#allocation5 + $0x240] sm:$0xff]
      %v121 = vld [vmem:[#allocation5 + $0x248] sm:$0xff]
      %v122 = vld [vmem:[#allocation5 + $0x250] sm:$0xff]
      %v123 = vld [vmem:[#allocation5 + $0x258] sm:$0xff]
      %v124 = vld [vmem:[#allocation5 + $0x260] sm:$0xff]
      %v125 = vld [vmem:[#allocation5 + $0x268] sm:$0xff]
      %v126 = vld [vmem:[#allocation5 + $0x270] sm:$0xff]
      %v127 = vld [vmem:[#allocation5 + $0x278] sm:$0xff]
      %v128 = vld [vmem:[#allocation5 + $0x280] sm:$0xff]
      %v129 = vld [vmem:[#allocation5 + $0x288] sm:$0xff]
      %v130 = vld [vmem:[#allocation5 + $0x290] sm:$0xff]
      %v131 = vld [vmem:[#allocation5 + $0x298] sm:$0xff]
      %v132 = vld [vmem:[#allocation5 + $0x2a0] sm:$0xff]
      %v133 = vld [vmem:[#allocation5 + $0x2a8] sm:$0xff]
      %v134 = vld [vmem:[#allocation5 + $0x2b0] sm:$0xff]
      %v135 = vld [vmem:[#allocation5 + $0x2b8] sm:$0xff]
      %v136 = vld [vmem:[#allocation5 + $0x2c0] sm:$0xff]
      %v137 = vld [vmem:[#allocation5 + $0x2c8] sm:$0xff]
      %v138 = vld [vmem:[#allocation5 + $0x2d0] sm:$0xff]
      %v139 = vld [vmem:[#allocation5 + $0x2d8] sm:$0xff]
      %v140 = vld [vmem:[#allocation5 + $0x2e0] sm:$0xff]
      %v141 = vld [vmem:[#allocation5 + $0x2e8] sm:$0xff]
      %v142 = vld [vmem:[#allocation5 + $0x2f0] sm:$0xff]
      %v143 = vld [vmem:[#allocation5 + $0x2f8] sm:$0xff]
      %v144 = vld [vmem:[#allocation5 + $0x300] sm:$0xff]
      %v145 = vld [vmem:[#allocation5 + $0x308] sm:$0xff]
      %v146 = vld [vmem:[#allocation5 + $0x310] sm:$0xff]
      %v147 = vld [vmem:[#allocation5 + $0x318] sm:$0xff]
      %v148 = vld [vmem:[#allocation5 + $0x320] sm:$0xff]
      %v149 = vld [vmem:[#allocation5 + $0x328] sm:$0xff]
      %v150 = vld [vmem:[#allocation5 + $0x330] sm:$0xff]
      %v151 = vld [vmem:[#allocation5 + $0x338] sm:$0xff]
      %v152 = vld [vmem:[#allocation5 + $0x340] sm:$0xff]
      %v153 = vld [vmem:[#allocation5 + $0x348] sm:$0xff]
      %v154 = vld [vmem:[#allocation5 + $0x350] sm:$0xff]
      %v155 = vld [vmem:[#allocation5 + $0x358] sm:$0xff]
      %v156 = vld [vmem:[#allocation5 + $0x360] sm:$0xff]
      %v157 = vld [vmem:[#allocation5 + $0x368] sm:$0xff]
      %v158 = vld [vmem:[#allocation5 + $0x370] sm:$0xff]
      %v159 = vld [vmem:[#allocation5 + $0x378] sm:$0xff]
      %v160 = vld [vmem:[#allocation5 + $0x380] sm:$0xff]
      %v161 = vld [vmem:[#allocation5 + $0x388] sm:$0xff]
      %v162 = vld [vmem:[#allocation5 + $0x390] sm:$0xff]
      %v163 = vld [vmem:[#allocation5 + $0x398] sm:$0xff]
      %v164 = vld [vmem:[#allocation5 + $0x3a0] sm:$0xff]
      %v165 = vld [vmem:[#allocation5 + $0x3a8] sm:$0xff]
      %v166 = vld [vmem:[#allocation5 + $0x3b0] sm:$0xff]
      %v167 = vld [vmem:[#allocation5 + $0x3b8] sm:$0xff]
      %v168 = vld [vmem:[#allocation5 + $0x3c0] sm:$0xff]
      %v169 = vld [vmem:[#allocation5 + $0x3c8] sm:$0xff]
      %v170 = vld [vmem:[#allocation5 + $0x3d0] sm:$0xff]
      %v171 = vld [vmem:[#allocation5 + $0x3d8] sm:$0xff]
      %v172 = vld [vmem:[#allocation5 + $0x3e0] sm:$0xff]
      %v173 = vld [vmem:[#allocation5 + $0x3e8] sm:$0xff]
      %v174 = vld [vmem:[#allocation5 + $0x3f0] sm:$0xff]
      %v175 = vld [vmem:[#allocation5 + $0x3f8] sm:$0xff]
      %v176 = vld [vmem:[%s3] sm:$0xff]
      %v177 = vld [vmem:[%s3 + $0x8] sm:$0xff]
      %v178 = vld [vmem:[%s3 + $0x10] sm:$0xff]
      %v179 = vld [vmem:[%s3 + $0x18] sm:$0xff]
      %v180 = vld [vmem:[%s3 + $0x20] sm:$0xff]
      %v181 = vld [vmem:[%s3 + $0x28] sm:$0xff]
      %v182 = vld [vmem:[%s3 + $0x30] sm:$0xff]
      %v183 = vld [vmem:[%s3 + $0x38] sm:$0xff]
      %v184 = vld [vmem:[%s3 + $0x40] sm:$0xff]
      %v185 = vld [vmem:[%s3 + $0x48] sm:$0xff]
      %v186 = vld [vmem:[%s3 + $0x50] sm:$0xff]
      %v187 = vld [vmem:[%s3 + $0x58] sm:$0xff]
      %v188 = vld [vmem:[%s3 + $0x60] sm:$0xff]
      %v189 = vld [vmem:[%s3 + $0x68] sm:$0xff]
      %v190 = vld [vmem:[%s3 + $0x70] sm:$0xff]
      %v191 = vld [vmem:[%s3 + $0x78] sm:$0xff]
      %v192 = vld [vmem:[%s3 + $0x80] sm:$0xff]
      %v193 = vld [vmem:[%s3 + $0x88] sm:$0xff]
      %v194 = vld [vmem:[%s3 + $0x90] sm:$0xff]
      %v195 = vld [vmem:[%s3 + $0x98] sm:$0xff]
      %v196 = vld [vmem:[%s3 + $0xa0] sm:$0xff]
      %v197 = vld [vmem:[%s3 + $0xa8] sm:$0xff]
      %v198 = vld [vmem:[%s3 + $0xb0] sm:$0xff]
      %v199 = vld [vmem:[%s3 + $0xb8] sm:$0xff]
      %v200 = vld [vmem:[%s3 + $0xc0] sm:$0xff]
      %v201 = vld [vmem:[%s3 + $0xc8] sm:$0xff]
      %v202 = vld [vmem:[%s3 + $0xd0] sm:$0xff]
      %v203 = vld [vmem:[%s3 + $0xd8] sm:$0xff]
      %v204 = vld [vmem:[%s3 + $0xe0] sm:$0xff]
      %v205 = vld [vmem:[%s3 + $0xe8] sm:$0xff]
      %v206 = vld [vmem:[%s3 + $0xf0] sm:$0xff]
      %v207 = vld [vmem:[%s3 + $0xf8] sm:$0xff]
      %v208 = vld [vmem:[%s4] sm:$0x1]
      %v210 = vlaneseq
      %v211 = vshrl.u32 %v210, 7
      %v212 = vsub.s32 0, %v211
      %v213 = vrot.slane %v208, %v212
      %215 = vmatprep.subr.mxu0 0.0
      %216 = vmatpush1.msra.mxu0 %v176
      %217 = vmatprep.subr.mxu0 0.0
      %218 = vmatpush1.msra.mxu0 %v177
      %219 = vmatprep.subr.mxu0 0.0
      %220 = vmatpush1.msra.mxu0 %v178
      %221 = vmatprep.subr.mxu0 0.0
      %222 = vmatpush1.msra.mxu0 %v179
      %223 = vmatprep.subr.mxu0 0.0
      %224 = vmatpush1.msra.mxu0 %v180
      %225 = vmatprep.subr.mxu0 0.0
      %226 = vmatpush1.msra.mxu0 %v181
      %227 = vmatprep.subr.mxu0 0.0
      %228 = vmatpush1.msra.mxu0 %v182
      %229 = vmatprep.subr.mxu0 0.0
      %230 = vmatpush1.msra.mxu0 %v183
      %231 = vmatprep.subr.mxu0 0.0
      %232 = vmatpush1.msra.mxu0 %v184
      %233 = vmatprep.subr.mxu0 0.0
      %234 = vmatpush1.msra.mxu0 %v185
      %235 = vmatprep.subr.mxu0 0.0
      %236 = vmatpush1.msra.mxu0 %v186
      %237 = vmatprep.subr.mxu0 0.0
      %238 = vmatpush1.msra.mxu0 %v187
      %239 = vmatprep.subr.mxu0 0.0
      %240 = vmatpush1.msra.mxu0 %v188
      %241 = vmatprep.subr.mxu0 0.0
      %242 = vmatpush1.msra.mxu0 %v189
      %243 = vmatprep.subr.mxu0 0.0
      %244 = vmatpush1.msra.mxu0 %v190
      %245 = vmatprep.subr.mxu0 0.0
      %246 = vmatpush1.msra.mxu0 %v191
      %247 = vmatprep.subr.mxu0 0.0
      %248 = vmatpush1.msra.mxu0 %v192
      %249 = vmatprep.subr.mxu0 0.0
      %250 = vmatpush1.msra.mxu0 %v193
      %251 = vmatprep.subr.mxu0 0.0
      %252 = vmatpush1.msra.mxu0 %v194
      %253 = vmatprep.subr.mxu0 0.0
      %254 = vmatpush1.msra.mxu0 %v195
      %255 = vmatprep.subr.mxu0 0.0
      %256 = vmatpush1.msra.mxu0 %v196
      %257 = vmatprep.subr.mxu0 0.0
      %258 = vmatpush1.msra.mxu0 %v197
      %259 = vmatprep.subr.mxu0 0.0
      %260 = vmatpush1.msra.mxu0 %v198
      %261 = vmatprep.subr.mxu0 0.0
      %262 = vmatpush1.msra.mxu0 %v199
      %263 = vmatprep.subr.mxu0 0.0
      %264 = vmatpush1.msra.mxu0 %v200
      %265 = vmatprep.subr.mxu0 0.0
      %266 = vmatpush1.msra.mxu0 %v201
      %267 = vmatprep.subr.mxu0 0.0
      %268 = vmatpush1.msra.mxu0 %v202
      %269 = vmatprep.subr.mxu0 0.0
      %270 = vmatpush1.msra.mxu0 %v203
      %271 = vmatprep.subr.mxu0 0.0
      %272 = vmatpush1.msra.mxu0 %v204
      %273 = vmatprep.subr.mxu0 0.0
      %274 = vmatpush1.msra.mxu0 %v205
      %275 = vmatprep.subr.mxu0 0.0
      %276 = vmatpush1.msra.mxu0 %v206
      %277 = vmatprep.subr.mxu0 0.0
      %278 = vmatpush1.msra.mxu0 %v207
      %279 = vmatprep.mubr.f32.mxu0 %v49
      %280 = vmatmul.mubr.f32.gmra.mrb[0].mxu0 %v48
      %v281 = vpop.f32.mrb[0].mxu0
      %v282 = vadd.f32 %v213, %v281
      %v283 = vpop.f32.mrb[0].mxu0
      %284 = vmatprep.mubr.f32.mxu0 %v51
      %285 = vmatmul.mubr.f32.gmra.mrb[0].mxu0 %v50
      %v286 = vpop.f32.mrb[0].mxu0
      %v287 = vadd.f32 %v213, %v286
      %v288 = vpop.f32.mrb[0].mxu0
      %289 = vmatprep.mubr.f32.mxu0 %v53
      %290 = vmatmul.mubr.f32.gmra.mrb[0].mxu0 %v52
      %v291 = vpop.f32.mrb[0].mxu0
      %v292 = vadd.f32 %v213, %v291
      %v293 = vpop.f32.mrb[0].mxu0
      %294 = vmatprep.mubr.f32.mxu0 %v55
      %295 = vmatmul.mubr.f32.gmra.mrb[0].mxu0 %v54
      %v296 = vpop.f32.mrb[0].mxu0
      %v297 = vadd.f32 %v213, %v296
      %v298 = vpop.f32.mrb[0].mxu0
      %299 = vmatprep.mubr.f32.mxu0 %v57
      %300 = vmatmul.mubr.f32.gmra.mrb[0].mxu0 %v56
      %v301 = vpop.f32.mrb[0].mxu0
      %v302 = vadd.f32 %v213, %v301
      %v303 = vpop.f32.mrb[0].mxu0
      %304 = vmatprep.mubr.f32.mxu0 %v59
      %305 = vmatmul.mubr.f32.gmra.mrb[0].mxu0 %v58
      %v306 = vpop.f32.mrb[0].mxu0
      %v307 = vadd.f32 %v213, %v306
      %v308 = vpop.f32.mrb[0].mxu0
      %309 = vmatprep.mubr.f32.mxu0 %v61
      %310 = vmatmul.mubr.f32.gmra.mrb[0].mxu0 %v60
      %v311 = vpop.f32.mrb[0].mxu0
      %v312 = vadd.f32 %v213, %v311
      %v313 = vpop.f32.mrb[0].mxu0
      %314 = vmatprep.mubr.f32.mxu0 %v63
      %315 = vmatmul.mubr.f32.gmra.mrb[0].mxu0 %v62
      %v316 = vpop.f32.mrb[0].mxu0
      %v317 = vadd.f32 %v213, %v316
      %v318 = vpop.f32.mrb[0].mxu0
      %319 = vmatprep.mubr.f32.mxu0 %v65
      %320 = vmatmul.mubr.f32.gmra.mrb[0].mxu0 %v64
      %v321 = vpop.f32.mrb[0].mxu0
      %v322 = vadd.f32 %v213, %v321
      %v323 = vpop.f32.mrb[0].mxu0
      %324 = vmatprep.mubr.f32.mxu0 %v67
      %325 = vmatmul.mubr.f32.gmra.mrb[0].mxu0 %v66
      %v326 = vpop.f32.mrb[0].mxu0
      %v327 = vadd.f32 %v213, %v326
      %v328 = vpop.f32.mrb[0].mxu0
      %329 = vmatprep.mubr.f32.mxu0 %v69
      %330 = vmatmul.mubr.f32.gmra.mrb[0].mxu0 %v68
      %v331 = vpop.f32.mrb[0].mxu0
      %v332 = vadd.f32 %v213, %v331
      %v333 = vpop.f32.mrb[0].mxu0
      %334 = vmatprep.mubr.f32.mxu0 %v71
      %335 = vmatmul.mubr.f32.gmra.mrb[0].mxu0 %v70
      %v336 = vpop.f32.mrb[0].mxu0
      %v337 = vadd.f32 %v213, %v336
      %v338 = vpop.f32.mrb[0].mxu0
      %339 = vmatprep.mubr.f32.mxu0 %v73
      %340 = vmatmul.mubr.f32.gmra.mrb[0].mxu0 %v72
      %v341 = vpop.f32.mrb[0].mxu0
      %v342 = vadd.f32 %v213, %v341
      %v343 = vpop.f32.mrb[0].mxu0
      %344 = vmatprep.mubr.f32.mxu0 %v75
      %345 = vmatmul.mubr.f32.gmra.mrb[0].mxu0 %v74
      %v346 = vpop.f32.mrb[0].mxu0
      %v347 = vadd.f32 %v213, %v346
      %v348 = vpop.f32.mrb[0].mxu0
      %349 = vmatprep.mubr.f32.mxu0 %v77
      %350 = vmatmul.mubr.f32.gmra.mrb[0].mxu0 %v76
      %v351 = vpop.f32.mrb[0].mxu0
      %v352 = vadd.f32 %v213, %v351
      %v353 = vpop.f32.mrb[0].mxu0
      %354 = vmatprep.mubr.f32.mxu0 %v79
      %355 = vmatmul.mubr.f32.gmra.mrb[0].mxu0 %v78
      %v356 = vpop.f32.mrb[0].mxu0
      %v357 = vadd.f32 %v213, %v356
      %v358 = vpop.f32.mrb[0].mxu0
      %359 = vmatprep.mubr.f32.mxu0 %v81
      %360 = vmatmul.mubr.f32.gmra.mrb[0].mxu0 %v80
      %v361 = vpop.f32.mrb[0].mxu0
      %v362 = vadd.f32 %v213, %v361
      %v363 = vpop.f32.mrb[0].mxu0
      %364 = vmatprep.mubr.f32.mxu0 %v83
      %365 = vmatmul.mubr.f32.gmra.mrb[0].mxu0 %v82
      %v366 = vpop.f32.mrb[0].mxu0
      %v367 = vadd.f32 %v213, %v366
      %v368 = vpop.f32.mrb[0].mxu0
      %369 = vmatprep.mubr.f32.mxu0 %v85
      %370 = vmatmul.mubr.f32.gmra.mrb[0].mxu0 %v84
      %v371 = vpop.f32.mrb[0].mxu0
      %v372 = vadd.f32 %v213, %v371
      %v373 = vpop.f32.mrb[0].mxu0
      %374 = vmatprep.mubr.f32.mxu0 %v87
      %375 = vmatmul.mubr.f32.gmra.mrb[0].mxu0 %v86
      %v376 = vpop.f32.mrb[0].mxu0
      %v377 = vadd.f32 %v213, %v376
      %v378 = vpop.f32.mrb[0].mxu0
      %379 = vmatprep.mubr.f32.mxu0 %v89
      %380 = vmatmul.mubr.f32.gmra.mrb[0].mxu0 %v88
      %v381 = vpop.f32.mrb[0].mxu0
      %v382 = vadd.f32 %v213, %v381
      %v383 = vpop.f32.mrb[0].mxu0
      %384 = vmatprep.mubr.f32.mxu0 %v91
      %385 = vmatmul.mubr.f32.gmra.mrb[0].mxu0 %v90
      %v386 = vpop.f32.mrb[0].mxu0
      %v387 = vadd.f32 %v213, %v386
      %v388 = vpop.f32.mrb[0].mxu0
      %389 = vmatprep.mubr.f32.mxu0 %v93
      %390 = vmatmul.mubr.f32.gmra.mrb[0].mxu0 %v92
      %v391 = vpop.f32.mrb[0].mxu0
      %v392 = vadd.f32 %v213, %v391
      %v393 = vpop.f32.mrb[0].mxu0
      %394 = vmatprep.mubr.f32.mxu0 %v95
      %395 = vmatmul.mubr.f32.gmra.mrb[0].mxu0 %v94
      %v396 = vpop.f32.mrb[0].mxu0
      %v397 = vadd.f32 %v213, %v396
      %v398 = vpop.f32.mrb[0].mxu0
      %399 = vmatprep.mubr.f32.mxu0 %v97
      %400 = vmatmul.mubr.f32.gmra.mrb[0].mxu0 %v96
      %v401 = vpop.f32.mrb[0].mxu0
      %v402 = vadd.f32 %v213, %v401
      %v403 = vpop.f32.mrb[0].mxu0
      %404 = vmatprep.mubr.f32.mxu0 %v99
      %405 = vmatmul.mubr.f32.gmra.mrb[0].mxu0 %v98
      %v406 = vpop.f32.mrb[0].mxu0
      %v407 = vadd.f32 %v213, %v406
      %v408 = vpop.f32.mrb[0].mxu0
      %409 = vmatprep.mubr.f32.mxu0 %v101
      %410 = vmatmul.mubr.f32.gmra.mrb[0].mxu0 %v100
      %v411 = vpop.f32.mrb[0].mxu0
      %v412 = vadd.f32 %v213, %v411
      %v413 = vpop.f32.mrb[0].mxu0
      %414 = vmatprep.mubr.f32.mxu0 %v103
      %415 = vmatmul.mubr.f32.gmra.mrb[0].mxu0 %v102
      %v416 = vpop.f32.mrb[0].mxu0
      %v417 = vadd.f32 %v213, %v416
      %v418 = vpop.f32.mrb[0].mxu0
      %419 = vmatprep.mubr.f32.mxu0 %v105
      %420 = vmatmul.mubr.f32.gmra.mrb[0].mxu0 %v104
      %v421 = vpop.f32.mrb[0].mxu0
      %v422 = vadd.f32 %v213, %v421
      %v423 = vpop.f32.mrb[0].mxu0
      %424 = vmatprep.mubr.f32.mxu0 %v107
      %425 = vmatmul.mubr.f32.gmra.mrb[0].mxu0 %v106
      %v426 = vpop.f32.mrb[0].mxu0
      %v427 = vadd.f32 %v213, %v426
      %v428 = vpop.f32.mrb[0].mxu0
      %429 = vmatprep.mubr.f32.mxu0 %v109
      %430 = vmatmul.mubr.f32.gmra.mrb[0].mxu0 %v108
      %v431 = vpop.f32.mrb[0].mxu0
      %v432 = vadd.f32 %v213, %v431
      %v433 = vpop.f32.mrb[0].mxu0
      %434 = vmatprep.mubr.f32.mxu0 %v111
      %435 = vmatmul.mubr.f32.gmra.mrb[0].mxu0 %v110
      %v436 = vpop.f32.mrb[0].mxu0
      %v437 = vadd.f32 %v213, %v436
      %v438 = vpop.f32.mrb[0].mxu0
      %439 = vmatprep.mubr.f32.mxu0 %v113
      %440 = vmatmul.mubr.f32.gmra.mrb[0].mxu0 %v112
      %v441 = vpop.f32.mrb[0].mxu0
      %v442 = vadd.f32 %v213, %v441
      %v443 = vpop.f32.mrb[0].mxu0
      %444 = vmatprep.mubr.f32.mxu0 %v115
      %445 = vmatmul.mubr.f32.gmra.mrb[0].mxu0 %v114
      %v446 = vpop.f32.mrb[0].mxu0
      %v447 = vadd.f32 %v213, %v446
      %v448 = vpop.f32.mrb[0].mxu0
      %449 = vmatprep.mubr.f32.mxu0 %v117
      %450 = vmatmul.mubr.f32.gmra.mrb[0].mxu0 %v116
      %v451 = vpop.f32.mrb[0].mxu0
      %v452 = vadd.f32 %v213, %v451
      %v453 = vpop.f32.mrb[0].mxu0
      %454 = vmatprep.mubr.f32.mxu0 %v119
      %455 = vmatmul.mubr.f32.gmra.mrb[0].mxu0 %v118
      %v456 = vpop.f32.mrb[0].mxu0
      %v457 = vadd.f32 %v213, %v456
      %v458 = vpop.f32.mrb[0].mxu0
      %459 = vmatprep.mubr.f32.mxu0 %v121
      %460 = vmatmul.mubr.f32.gmra.mrb[0].mxu0 %v120
      %v461 = vpop.f32.mrb[0].mxu0
      %v462 = vadd.f32 %v213, %v461
      %v463 = vpop.f32.mrb[0].mxu0
      %464 = vmatprep.mubr.f32.mxu0 %v123
      %465 = vmatmul.mubr.f32.gmra.mrb[0].mxu0 %v122
      %v466 = vpop.f32.mrb[0].mxu0
      %v467 = vadd.f32 %v213, %v466
      %v468 = vpop.f32.mrb[0].mxu0
      %469 = vmatprep.mubr.f32.mxu0 %v125
      %470 = vmatmul.mubr.f32.gmra.mrb[0].mxu0 %v124
      %v471 = vpop.f32.mrb[0].mxu0
      %v472 = vadd.f32 %v213, %v471
      %v473 = vpop.f32.mrb[0].mxu0
      %474 = vmatprep.mubr.f32.mxu0 %v127
      %475 = vmatmul.mubr.f32.gmra.mrb[0].mxu0 %v126
      %v476 = vpop.f32.mrb[0].mxu0
      %v477 = vadd.f32 %v213, %v476
      %v478 = vpop.f32.mrb[0].mxu0
      %479 = vmatprep.mubr.f32.mxu0 %v129
      %480 = vmatmul.mubr.f32.gmra.mrb[0].mxu0 %v128
      %v481 = vpop.f32.mrb[0].mxu0
      %v482 = vadd.f32 %v213, %v481
      %v483 = vpop.f32.mrb[0].mxu0
      %484 = vmatprep.mubr.f32.mxu0 %v131
      %485 = vmatmul.mubr.f32.gmra.mrb[0].mxu0 %v130
      %v486 = vpop.f32.mrb[0].mxu0
      %v487 = vadd.f32 %v213, %v486
      %v488 = vpop.f32.mrb[0].mxu0
      %489 = vmatprep.mubr.f32.mxu0 %v133
      %490 = vmatmul.mubr.f32.gmra.mrb[0].mxu0 %v132
      %v491 = vpop.f32.mrb[0].mxu0
      %v492 = vadd.f32 %v213, %v491
      %v493 = vpop.f32.mrb[0].mxu0
      %494 = vmatprep.mubr.f32.mxu0 %v135
      %495 = vmatmul.mubr.f32.gmra.mrb[0].mxu0 %v134
      %v496 = vpop.f32.mrb[0].mxu0
      %v497 = vadd.f32 %v213, %v496
      %v498 = vpop.f32.mrb[0].mxu0
      %499 = vmatprep.mubr.f32.mxu0 %v137
      %500 = vmatmul.mubr.f32.gmra.mrb[0].mxu0 %v136
      %v501 = vpop.f32.mrb[0].mxu0
      %v502 = vadd.f32 %v213, %v501
      %v503 = vpop.f32.mrb[0].mxu0
      %504 = vmatprep.mubr.f32.mxu0 %v139
      %505 = vmatmul.mubr.f32.gmra.mrb[0].mxu0 %v138
      %v506 = vpop.f32.mrb[0].mxu0
      %v507 = vadd.f32 %v213, %v506
      %v508 = vpop.f32.mrb[0].mxu0
      %509 = vmatprep.mubr.f32.mxu0 %v141
      %510 = vmatmul.mubr.f32.gmra.mrb[0].mxu0 %v140
      %v511 = vpop.f32.mrb[0].mxu0
      %v512 = vadd.f32 %v213, %v511
      %v513 = vpop.f32.mrb[0].mxu0
      %514 = vmatprep.mubr.f32.mxu0 %v143
      %515 = vmatmul.mubr.f32.gmra.mrb[0].mxu0 %v142
      %v516 = vpop.f32.mrb[0].mxu0
      %v517 = vadd.f32 %v213, %v516
      %v518 = vpop.f32.mrb[0].mxu0
      %519 = vmatprep.mubr.f32.mxu0 %v145
      %520 = vmatmul.mubr.f32.gmra.mrb[0].mxu0 %v144
      %v521 = vpop.f32.mrb[0].mxu0
      %v522 = vadd.f32 %v213, %v521
      %v523 = vpop.f32.mrb[0].mxu0
      %524 = vmatprep.mubr.f32.mxu0 %v147
      %525 = vmatmul.mubr.f32.gmra.mrb[0].mxu0 %v146
      %v526 = vpop.f32.mrb[0].mxu0
      %v527 = vadd.f32 %v213, %v526
      %v528 = vpop.f32.mrb[0].mxu0
      %529 = vmatprep.mubr.f32.mxu0 %v149
      %530 = vmatmul.mubr.f32.gmra.mrb[0].mxu0 %v148
      %v531 = vpop.f32.mrb[0].mxu0
      %v532 = vadd.f32 %v213, %v531
      %v533 = vpop.f32.mrb[0].mxu0
      %534 = vmatprep.mubr.f32.mxu0 %v151
      %535 = vmatmul.mubr.f32.gmra.mrb[0].mxu0 %v150
      %v536 = vpop.f32.mrb[0].mxu0
      %v537 = vadd.f32 %v213, %v536
      %v538 = vpop.f32.mrb[0].mxu0
      %539 = vmatprep.mubr.f32.mxu0 %v153
      %540 = vmatmul.mubr.f32.gmra.mrb[0].mxu0 %v152
      %v541 = vpop.f32.mrb[0].mxu0
      %v542 = vadd.f32 %v213, %v541
      %v543 = vpop.f32.mrb[0].mxu0
      %544 = vmatprep.mubr.f32.mxu0 %v155
      %545 = vmatmul.mubr.f32.gmra.mrb[0].mxu0 %v154
      %v546 = vpop.f32.mrb[0].mxu0
      %v547 = vadd.f32 %v213, %v546
      %v548 = vpop.f32.mrb[0].mxu0
      %549 = vmatprep.mubr.f32.mxu0 %v157
      %550 = vmatmul.mubr.f32.gmra.mrb[0].mxu0 %v156
      %v551 = vpop.f32.mrb[0].mxu0
      %v552 = vadd.f32 %v213, %v551
      %v553 = vpop.f32.mrb[0].mxu0
      %554 = vmatprep.mubr.f32.mxu0 %v159
      %555 = vmatmul.mubr.f32.gmra.mrb[0].mxu0 %v158
      %v556 = vpop.f32.mrb[0].mxu0
      %v557 = vadd.f32 %v213, %v556
      %v558 = vpop.f32.mrb[0].mxu0
      %559 = vmatprep.mubr.f32.mxu0 %v161
      %560 = vmatmul.mubr.f32.gmra.mrb[0].mxu0 %v160
      %v561 = vpop.f32.mrb[0].mxu0
      %v562 = vadd.f32 %v213, %v561
      %v563 = vpop.f32.mrb[0].mxu0
      %564 = vmatprep.mubr.f32.mxu0 %v163
      %565 = vmatmul.mubr.f32.gmra.mrb[0].mxu0 %v162
      %v566 = vpop.f32.mrb[0].mxu0
      %v567 = vadd.f32 %v213, %v566
      %v568 = vpop.f32.mrb[0].mxu0
      %569 = vmatprep.mubr.f32.mxu0 %v165
      %570 = vmatmul.mubr.f32.gmra.mrb[0].mxu0 %v164
      %v571 = vpop.f32.mrb[0].mxu0
      %v572 = vadd.f32 %v213, %v571
      %v573 = vpop.f32.mrb[0].mxu0
      %574 = vmatprep.mubr.f32.mxu0 %v167
      %575 = vmatmul.mubr.f32.gmra.mrb[0].mxu0 %v166
      %v576 = vpop.f32.mrb[0].mxu0
      %v577 = vadd.f32 %v213, %v576
      %v578 = vpop.f32.mrb[0].mxu0
      %579 = vmatprep.mubr.f32.mxu0 %v169
      %580 = vmatmul.mubr.f32.gmra.mrb[0].mxu0 %v168
      %v581 = vpop.f32.mrb[0].mxu0
      %v582 = vadd.f32 %v213, %v581
      %v583 = vpop.f32.mrb[0].mxu0
      %584 = vmatprep.mubr.f32.mxu0 %v171
      %585 = vmatmul.mubr.f32.gmra.mrb[0].mxu0 %v170
      %v586 = vpop.f32.mrb[0].mxu0
      %v587 = vadd.f32 %v213, %v586
      %v588 = vpop.f32.mrb[0].mxu0
      %589 = vmatprep.mubr.f32.mxu0 %v173
      %590 = vmatmul.mubr.f32.gmra.mrb[0].mxu0 %v172
      %v591 = vpop.f32.mrb[0].mxu0
      %v592 = vadd.f32 %v213, %v591
      %v593 = vpop.f32.mrb[0].mxu0
      %594 = vmatprep.mubr.f32.mxu0 %v175
      %595 = vmatmul.mubr.f32.gmra.mrb[0].mxu0 %v174
      %v596 = vpop.f32.mrb[0].mxu0
      %v597 = vadd.f32 %v213, %v596
      %v598 = vpop.f32.mrb[0].mxu0
      %599 = vdwg.mxu0
      %v600 = vld [vmem:[%s5] sm:$0xff]
      %v601 = vld [vmem:[%s5 + $0x8] sm:$0xff]
      %v602 = vld [vmem:[%s5 + $0x10] sm:$0xff]
      %v603 = vld [vmem:[%s5 + $0x18] sm:$0xff]
      %v604 = vld [vmem:[%s5 + $0x20] sm:$0xff]
      %v605 = vld [vmem:[%s5 + $0x28] sm:$0xff]
      %v606 = vld [vmem:[%s5 + $0x30] sm:$0xff]
      %v607 = vld [vmem:[%s5 + $0x38] sm:$0xff]
      %v608 = vld [vmem:[%s5 + $0x40] sm:$0xff]
      %v609 = vld [vmem:[%s5 + $0x48] sm:$0xff]
      %v610 = vld [vmem:[%s5 + $0x50] sm:$0xff]
      %v611 = vld [vmem:[%s5 + $0x58] sm:$0xff]
      %v612 = vld [vmem:[%s5 + $0x60] sm:$0xff]
      %v613 = vld [vmem:[%s5 + $0x68] sm:$0xff]
      %v614 = vld [vmem:[%s5 + $0x70] sm:$0xff]
      %v615 = vld [vmem:[%s5 + $0x78] sm:$0xff]
      %v616 = vld [vmem:[%s5 + $0x80] sm:$0xff]
      %v617 = vld [vmem:[%s5 + $0x88] sm:$0xff]
      %v618 = vld [vmem:[%s5 + $0x90] sm:$0xff]
      %v619 = vld [vmem:[%s5 + $0x98] sm:$0xff]
      %v620 = vld [vmem:[%s5 + $0xa0] sm:$0xff]
      %v621 = vld [vmem:[%s5 + $0xa8] sm:$0xff]
      %v622 = vld [vmem:[%s5 + $0xb0] sm:$0xff]
      %v623 = vld [vmem:[%s5 + $0xb8] sm:$0xff]
      %v624 = vld [vmem:[%s5 + $0xc0] sm:$0xff]
      %v625 = vld [vmem:[%s5 + $0xc8] sm:$0xff]
      %v626 = vld [vmem:[%s5 + $0xd0] sm:$0xff]
      %v627 = vld [vmem:[%s5 + $0xd8] sm:$0xff]
      %v628 = vld [vmem:[%s5 + $0xe0] sm:$0xff]
      %v629 = vld [vmem:[%s5 + $0xe8] sm:$0xff]
      %v630 = vld [vmem:[%s5 + $0xf0] sm:$0xff]
      %v631 = vld [vmem:[%s5 + $0xf8] sm:$0xff]
      %v632 = vld [vmem:[%s5 + $0x100] sm:$0xff]
      %v633 = vld [vmem:[%s5 + $0x108] sm:$0xff]
      %v634 = vld [vmem:[%s5 + $0x110] sm:$0xff]
      %v635 = vld [vmem:[%s5 + $0x118] sm:$0xff]
      %v636 = vld [vmem:[%s5 + $0x120] sm:$0xff]
      %v637 = vld [vmem:[%s5 + $0x128] sm:$0xff]
      %v638 = vld [vmem:[%s5 + $0x130] sm:$0xff]
      %v639 = vld [vmem:[%s5 + $0x138] sm:$0xff]
      %v640 = vld [vmem:[%s5 + $0x140] sm:$0xff]
      %v641 = vld [vmem:[%s5 + $0x148] sm:$0xff]
      %v642 = vld [vmem:[%s5 + $0x150] sm:$0xff]
      %v643 = vld [vmem:[%s5 + $0x158] sm:$0xff]
      %v644 = vld [vmem:[%s5 + $0x160] sm:$0xff]
      %v645 = vld [vmem:[%s5 + $0x168] sm:$0xff]
      %v646 = vld [vmem:[%s5 + $0x170] sm:$0xff]
      %v647 = vld [vmem:[%s5 + $0x178] sm:$0xff]
      %v648 = vld [vmem:[%s5 + $0x180] sm:$0xff]
      %v649 = vld [vmem:[%s5 + $0x188] sm:$0xff]
      %v650 = vld [vmem:[%s5 + $0x190] sm:$0xff]
      %v651 = vld [vmem:[%s5 + $0x198] sm:$0xff]
      %v652 = vld [vmem:[%s5 + $0x1a0] sm:$0xff]
      %v653 = vld [vmem:[%s5 + $0x1a8] sm:$0xff]
      %v654 = vld [vmem:[%s5 + $0x1b0] sm:$0xff]
      %v655 = vld [vmem:[%s5 + $0x1b8] sm:$0xff]
      %v656 = vld [vmem:[%s5 + $0x1c0] sm:$0xff]
      %v657 = vld [vmem:[%s5 + $0x1c8] sm:$0xff]
      %v658 = vld [vmem:[%s5 + $0x1d0] sm:$0xff]
      %v659 = vld [vmem:[%s5 + $0x1d8] sm:$0xff]
      %v660 = vld [vmem:[%s5 + $0x1e0] sm:$0xff]
      %v661 = vld [vmem:[%s5 + $0x1e8] sm:$0xff]
      %v662 = vld [vmem:[%s5 + $0x1f0] sm:$0xff]
      %v663 = vld [vmem:[%s5 + $0x1f8] sm:$0xff]
      %vm664 = vcmp.ne.s32.totalorder %v600, 0
      %vm665 = vcmp.ne.s32.totalorder %v601, 0
      %vm666 = vcmp.ne.s32.totalorder %v602, 0
      %vm667 = vcmp.ne.s32.totalorder %v603, 0
      %vm668 = vcmp.ne.s32.totalorder %v604, 0
      %vm669 = vcmp.ne.s32.totalorder %v605, 0
      %vm670 = vcmp.ne.s32.totalorder %v606, 0
      %vm671 = vcmp.ne.s32.totalorder %v607, 0
      %vm672 = vcmp.ne.s32.totalorder %v608, 0
      %vm673 = vcmp.ne.s32.totalorder %v609, 0
      %vm674 = vcmp.ne.s32.totalorder %v610, 0
      %vm675 = vcmp.ne.s32.totalorder %v611, 0
      %vm676 = vcmp.ne.s32.totalorder %v612, 0
      %vm677 = vcmp.ne.s32.totalorder %v613, 0
      %vm678 = vcmp.ne.s32.totalorder %v614, 0
      %vm679 = vcmp.ne.s32.totalorder %v615, 0
      %vm680 = vcmp.ne.s32.totalorder %v616, 0
      %vm681 = vcmp.ne.s32.totalorder %v617, 0
      %vm682 = vcmp.ne.s32.totalorder %v618, 0
      %vm683 = vcmp.ne.s32.totalorder %v619, 0
      %vm684 = vcmp.ne.s32.totalorder %v620, 0
      %vm685 = vcmp.ne.s32.totalorder %v621, 0
      %vm686 = vcmp.ne.s32.totalorder %v622, 0
      %vm687 = vcmp.ne.s32.totalorder %v623, 0
      %vm688 = vcmp.ne.s32.totalorder %v624, 0
      %vm689 = vcmp.ne.s32.totalorder %v625, 0
      %vm690 = vcmp.ne.s32.totalorder %v626, 0
      %vm691 = vcmp.ne.s32.totalorder %v627, 0
      %vm692 = vcmp.ne.s32.totalorder %v628, 0
      %vm693 = vcmp.ne.s32.totalorder %v629, 0
      %vm694 = vcmp.ne.s32.totalorder %v630, 0
      %vm695 = vcmp.ne.s32.totalorder %v631, 0
      %vm696 = vcmp.ne.s32.totalorder %v632, 0
      %vm697 = vcmp.ne.s32.totalorder %v633, 0
      %vm698 = vcmp.ne.s32.totalorder %v634, 0
      %vm699 = vcmp.ne.s32.totalorder %v635, 0
      %vm700 = vcmp.ne.s32.totalorder %v636, 0
      %vm701 = vcmp.ne.s32.totalorder %v637, 0
      %vm702 = vcmp.ne.s32.totalorder %v638, 0
      %vm703 = vcmp.ne.s32.totalorder %v639, 0
      %vm704 = vcmp.ne.s32.totalorder %v640, 0
      %vm705 = vcmp.ne.s32.totalorder %v641, 0
      %vm706 = vcmp.ne.s32.totalorder %v642, 0
      %vm707 = vcmp.ne.s32.totalorder %v643, 0
      %vm708 = vcmp.ne.s32.totalorder %v644, 0
      %vm709 = vcmp.ne.s32.totalorder %v645, 0
      %vm710 = vcmp.ne.s32.totalorder %v646, 0
      %vm711 = vcmp.ne.s32.totalorder %v647, 0
      %vm712 = vcmp.ne.s32.totalorder %v648, 0
      %vm713 = vcmp.ne.s32.totalorder %v649, 0
      %vm714 = vcmp.ne.s32.totalorder %v650, 0
      %vm715 = vcmp.ne.s32.totalorder %v651, 0
      %vm716 = vcmp.ne.s32.totalorder %v652, 0
      %vm717 = vcmp.ne.s32.totalorder %v653, 0
      %vm718 = vcmp.ne.s32.totalorder %v654, 0
      %vm719 = vcmp.ne.s32.totalorder %v655, 0
      %vm720 = vcmp.ne.s32.totalorder %v656, 0
      %vm721 = vcmp.ne.s32.totalorder %v657, 0
      %vm722 = vcmp.ne.s32.totalorder %v658, 0
      %vm723 = vcmp.ne.s32.totalorder %v659, 0
      %vm724 = vcmp.ne.s32.totalorder %v660, 0
      %vm725 = vcmp.ne.s32.totalorder %v661, 0
      %vm726 = vcmp.ne.s32.totalorder %v662, 0
      %vm727 = vcmp.ne.s32.totalorder %v663, 0
      %v728 = vsel %vm664, 1, 0
      %v729 = vsel %vm665, 1, 0
      %v730 = vsel %vm666, 1, 0
      %v731 = vsel %vm667, 1, 0
      %v732 = vsel %vm668, 1, 0
      %v733 = vsel %vm669, 1, 0
      %v734 = vsel %vm670, 1, 0
      %v735 = vsel %vm671, 1, 0
      %v736 = vsel %vm672, 1, 0
      %v737 = vsel %vm673, 1, 0
      %v738 = vsel %vm674, 1, 0
      %v739 = vsel %vm675, 1, 0
      %v740 = vsel %vm676, 1, 0
      %v741 = vsel %vm677, 1, 0
      %v742 = vsel %vm678, 1, 0
      %v743 = vsel %vm679, 1, 0
      %v744 = vsel %vm680, 1, 0
      %v745 = vsel %vm681, 1, 0
      %v746 = vsel %vm682, 1, 0
      %v747 = vsel %vm683, 1, 0
      %v748 = vsel %vm684, 1, 0
      %v749 = vsel %vm685, 1, 0
      %v750 = vsel %vm686, 1, 0
      %v751 = vsel %vm687, 1, 0
      %v752 = vsel %vm688, 1, 0
      %v753 = vsel %vm689, 1, 0
      %v754 = vsel %vm690, 1, 0
      %v755 = vsel %vm691, 1, 0
      %v756 = vsel %vm692, 1, 0
      %v757 = vsel %vm693, 1, 0
      %v758 = vsel %vm694, 1, 0
      %v759 = vsel %vm695, 1, 0
      %v760 = vsel %vm696, 1, 0
      %v761 = vsel %vm697, 1, 0
      %v762 = vsel %vm698, 1, 0
      %v763 = vsel %vm699, 1, 0
      %v764 = vsel %vm700, 1, 0
      %v765 = vsel %vm701, 1, 0
      %v766 = vsel %vm702, 1, 0
      %v767 = vsel %vm703, 1, 0
      %v768 = vsel %vm704, 1, 0
      %v769 = vsel %vm705, 1, 0
      %v770 = vsel %vm706, 1, 0
      %v771 = vsel %vm707, 1, 0
      %v772 = vsel %vm708, 1, 0
      %v773 = vsel %vm709, 1, 0
      %v774 = vsel %vm710, 1, 0
      %v775 = vsel %vm711, 1, 0
      %v776 = vsel %vm712, 1, 0
      %v777 = vsel %vm713, 1, 0
      %v778 = vsel %vm714, 1, 0
      %v779 = vsel %vm715, 1, 0
      %v780 = vsel %vm716, 1, 0
      %v781 = vsel %vm717, 1, 0
      %v782 = vsel %vm718, 1, 0
      %v783 = vsel %vm719, 1, 0
      %v784 = vsel %vm720, 1, 0
      %v785 = vsel %vm721, 1, 0
      %v786 = vsel %vm722, 1, 0
      %v787 = vsel %vm723, 1, 0
      %v788 = vsel %vm724, 1, 0
      %v789 = vsel %vm725, 1, 0
      %v790 = vsel %vm726, 1, 0
      %v791 = vsel %vm727, 1, 0
      %792 = vset.pattern.permute.xlu0 0
      %793 = vperm.xlu0 %792, %v728
      %v794 = vpop.permute.xlu0 %793
      %795 = vset.pattern.permute.xlu0 0
      %796 = vperm.xlu0 %795, %v729
      %v797 = vpop.permute.xlu0 %796
      %798 = vset.pattern.permute.xlu0 0
      %799 = vperm.xlu0 %798, %v730
      %v800 = vpop.permute.xlu0 %799
      %801 = vset.pattern.permute.xlu0 0
      %802 = vperm.xlu0 %801, %v731
      %v803 = vpop.permute.xlu0 %802
      %804 = vset.pattern.permute.xlu0 0
      %805 = vperm.xlu0 %804, %v732
      %v806 = vpop.permute.xlu0 %805
      %807 = vset.pattern.permute.xlu0 0
      %808 = vperm.xlu0 %807, %v733
      %v809 = vpop.permute.xlu0 %808
      %810 = vset.pattern.permute.xlu0 0
      %811 = vperm.xlu0 %810, %v734
      %v812 = vpop.permute.xlu0 %811
      %813 = vset.pattern.permute.xlu0 0
      %814 = vperm.xlu0 %813, %v735
      %v815 = vpop.permute.xlu0 %814
      %816 = vset.pattern.permute.xlu0 0
      %817 = vperm.xlu0 %816, %v736
      %v818 = vpop.permute.xlu0 %817
      %819 = vset.pattern.permute.xlu0 0
      %820 = vperm.xlu0 %819, %v737
      %v821 = vpop.permute.xlu0 %820
      %822 = vset.pattern.permute.xlu0 0
      %823 = vperm.xlu0 %822, %v738
      %v824 = vpop.permute.xlu0 %823
      %825 = vset.pattern.permute.xlu0 0
      %826 = vperm.xlu0 %825, %v739
      %v827 = vpop.permute.xlu0 %826
      %828 = vset.pattern.permute.xlu0 0
      %829 = vperm.xlu0 %828, %v740
      %v830 = vpop.permute.xlu0 %829
      %831 = vset.pattern.permute.xlu0 0
      %832 = vperm.xlu0 %831, %v741
      %v833 = vpop.permute.xlu0 %832
      %834 = vset.pattern.permute.xlu0 0
      %835 = vperm.xlu0 %834, %v742
      %v836 = vpop.permute.xlu0 %835
      %837 = vset.pattern.permute.xlu0 0
      %838 = vperm.xlu0 %837, %v743
      %v839 = vpop.permute.xlu0 %838
      %840 = vset.pattern.permute.xlu0 0
      %841 = vperm.xlu0 %840, %v744
      %v842 = vpop.permute.xlu0 %841
      %843 = vset.pattern.permute.xlu0 0
      %844 = vperm.xlu0 %843, %v745
      %v845 = vpop.permute.xlu0 %844
      %846 = vset.pattern.permute.xlu0 0
      %847 = vperm.xlu0 %846, %v746
      %v848 = vpop.permute.xlu0 %847
      %849 = vset.pattern.permute.xlu0 0
      %850 = vperm.xlu0 %849, %v747
      %v851 = vpop.permute.xlu0 %850
      %852 = vset.pattern.permute.xlu0 0
      %853 = vperm.xlu0 %852, %v748
      %v854 = vpop.permute.xlu0 %853
      %855 = vset.pattern.permute.xlu0 0
      %856 = vperm.xlu0 %855, %v749
      %v857 = vpop.permute.xlu0 %856
      %858 = vset.pattern.permute.xlu0 0
      %859 = vperm.xlu0 %858, %v750
      %v860 = vpop.permute.xlu0 %859
      %861 = vset.pattern.permute.xlu0 0
      %862 = vperm.xlu0 %861, %v751
      %v863 = vpop.permute.xlu0 %862
      %864 = vset.pattern.permute.xlu0 0
      %865 = vperm.xlu0 %864, %v752
      %v866 = vpop.permute.xlu0 %865
      %867 = vset.pattern.permute.xlu0 0
      %868 = vperm.xlu0 %867, %v753
      %v869 = vpop.permute.xlu0 %868
      %870 = vset.pattern.permute.xlu0 0
      %871 = vperm.xlu0 %870, %v754
      %v872 = vpop.permute.xlu0 %871
      %873 = vset.pattern.permute.xlu0 0
      %874 = vperm.xlu0 %873, %v755
      %v875 = vpop.permute.xlu0 %874
      %876 = vset.pattern.permute.xlu0 0
      %877 = vperm.xlu0 %876, %v756
      %v878 = vpop.permute.xlu0 %877
      %879 = vset.pattern.permute.xlu0 0
      %880 = vperm.xlu0 %879, %v757
      %v881 = vpop.permute.xlu0 %880
      %882 = vset.pattern.permute.xlu0 0
      %883 = vperm.xlu0 %882, %v758
      %v884 = vpop.permute.xlu0 %883
      %885 = vset.pattern.permute.xlu0 0
      %886 = vperm.xlu0 %885, %v759
      %v887 = vpop.permute.xlu0 %886
      %888 = vset.pattern.permute.xlu0 0
      %889 = vperm.xlu0 %888, %v760
      %v890 = vpop.permute.xlu0 %889
      %891 = vset.pattern.permute.xlu0 0
      %892 = vperm.xlu0 %891, %v761
      %v893 = vpop.permute.xlu0 %892
      %894 = vset.pattern.permute.xlu0 0
      %895 = vperm.xlu0 %894, %v762
      %v896 = vpop.permute.xlu0 %895
      %897 = vset.pattern.permute.xlu0 0
      %898 = vperm.xlu0 %897, %v763
      %v899 = vpop.permute.xlu0 %898
      %900 = vset.pattern.permute.xlu0 0
      %901 = vperm.xlu0 %900, %v764
      %v902 = vpop.permute.xlu0 %901
      %903 = vset.pattern.permute.xlu0 0
      %904 = vperm.xlu0 %903, %v765
      %v905 = vpop.permute.xlu0 %904
      %906 = vset.pattern.permute.xlu0 0
      %907 = vperm.xlu0 %906, %v766
      %v908 = vpop.permute.xlu0 %907
      %909 = vset.pattern.permute.xlu0 0
      %910 = vperm.xlu0 %909, %v767
      %v911 = vpop.permute.xlu0 %910
      %912 = vset.pattern.permute.xlu0 0
      %913 = vperm.xlu0 %912, %v768
      %v914 = vpop.permute.xlu0 %913
      %915 = vset.pattern.permute.xlu0 0
      %916 = vperm.xlu0 %915, %v769
      %v917 = vpop.permute.xlu0 %916
      %918 = vset.pattern.permute.xlu0 0
      %919 = vperm.xlu0 %918, %v770
      %v920 = vpop.permute.xlu0 %919
      %921 = vset.pattern.permute.xlu0 0
      %922 = vperm.xlu0 %921, %v771
      %v923 = vpop.permute.xlu0 %922
      %924 = vset.pattern.permute.xlu0 0
      %925 = vperm.xlu0 %924, %v772
      %v926 = vpop.permute.xlu0 %925
      %927 = vset.pattern.permute.xlu0 0
      %928 = vperm.xlu0 %927, %v773
      %v929 = vpop.permute.xlu0 %928
      %930 = vset.pattern.permute.xlu0 0
      %931 = vperm.xlu0 %930, %v774
      %v932 = vpop.permute.xlu0 %931
      %933 = vset.pattern.permute.xlu0 0
      %934 = vperm.xlu0 %933, %v775
      %v935 = vpop.permute.xlu0 %934
      %936 = vset.pattern.permute.xlu0 0
      %937 = vperm.xlu0 %936, %v776
      %v938 = vpop.permute.xlu0 %937
      %939 = vset.pattern.permute.xlu0 0
      %940 = vperm.xlu0 %939, %v777
      %v941 = vpop.permute.xlu0 %940
      %942 = vset.pattern.permute.xlu0 0
      %943 = vperm.xlu0 %942, %v778
      %v944 = vpop.permute.xlu0 %943
      %945 = vset.pattern.permute.xlu0 0
      %946 = vperm.xlu0 %945, %v779
      %v947 = vpop.permute.xlu0 %946
      %948 = vset.pattern.permute.xlu0 0
      %949 = vperm.xlu0 %948, %v780
      %v950 = vpop.permute.xlu0 %949
      %951 = vset.pattern.permute.xlu0 0
      %952 = vperm.xlu0 %951, %v781
      %v953 = vpop.permute.xlu0 %952
      %954 = vset.pattern.permute.xlu0 0
      %955 = vperm.xlu0 %954, %v782
      %v956 = vpop.permute.xlu0 %955
      %957 = vset.pattern.permute.xlu0 0
      %958 = vperm.xlu0 %957, %v783
      %v959 = vpop.permute.xlu0 %958
      %960 = vset.pattern.permute.xlu0 0
      %961 = vperm.xlu0 %960, %v784
      %v962 = vpop.permute.xlu0 %961
      %963 = vset.pattern.permute.xlu0 0
      %964 = vperm.xlu0 %963, %v785
      %v965 = vpop.permute.xlu0 %964
      %966 = vset.pattern.permute.xlu0 0
      %967 = vperm.xlu0 %966, %v786
      %v968 = vpop.permute.xlu0 %967
      %969 = vset.pattern.permute.xlu0 0
      %970 = vperm.xlu0 %969, %v787
      %v971 = vpop.permute.xlu0 %970
      %972 = vset.pattern.permute.xlu0 0
      %973 = vperm.xlu0 %972, %v788
      %v974 = vpop.permute.xlu0 %973
      %975 = vset.pattern.permute.xlu0 0
      %976 = vperm.xlu0 %975, %v789
      %v977 = vpop.permute.xlu0 %976
      %978 = vset.pattern.permute.xlu0 0
      %979 = vperm.xlu0 %978, %v790
      %v980 = vpop.permute.xlu0 %979
      %981 = vset.pattern.permute.xlu0 0
      %982 = vperm.xlu0 %981, %v791
      %v983 = vpop.permute.xlu0 %982
      %vm984 = vcmp.eq.s32.totalorder %v794, 1
      %vm985 = vcmp.eq.s32.totalorder %v797, 1
      %vm986 = vcmp.eq.s32.totalorder %v800, 1
      %vm987 = vcmp.eq.s32.totalorder %v803, 1
      %vm988 = vcmp.eq.s32.totalorder %v806, 1
      %vm989 = vcmp.eq.s32.totalorder %v809, 1
      %vm990 = vcmp.eq.s32.totalorder %v812, 1
      %vm991 = vcmp.eq.s32.totalorder %v815, 1
      %vm992 = vcmp.eq.s32.totalorder %v818, 1
      %vm993 = vcmp.eq.s32.totalorder %v821, 1
      %vm994 = vcmp.eq.s32.totalorder %v824, 1
      %vm995 = vcmp.eq.s32.totalorder %v827, 1
      %vm996 = vcmp.eq.s32.totalorder %v830, 1
      %vm997 = vcmp.eq.s32.totalorder %v833, 1
      %vm998 = vcmp.eq.s32.totalorder %v836, 1
      %vm999 = vcmp.eq.s32.totalorder %v839, 1
      %vm1000 = vcmp.eq.s32.totalorder %v842, 1
      %vm1001 = vcmp.eq.s32.totalorder %v845, 1
      %vm1002 = vcmp.eq.s32.totalorder %v848, 1
      %vm1003 = vcmp.eq.s32.totalorder %v851, 1
      %vm1004 = vcmp.eq.s32.totalorder %v854, 1
      %vm1005 = vcmp.eq.s32.totalorder %v857, 1
      %vm1006 = vcmp.eq.s32.totalorder %v860, 1
      %vm1007 = vcmp.eq.s32.totalorder %v863, 1
      %vm1008 = vcmp.eq.s32.totalorder %v866, 1
      %vm1009 = vcmp.eq.s32.totalorder %v869, 1
      %vm1010 = vcmp.eq.s32.totalorder %v872, 1
      %vm1011 = vcmp.eq.s32.totalorder %v875, 1
      %vm1012 = vcmp.eq.s32.totalorder %v878, 1
      %vm1013 = vcmp.eq.s32.totalorder %v881, 1
      %vm1014 = vcmp.eq.s32.totalorder %v884, 1
      %vm1015 = vcmp.eq.s32.totalorder %v887, 1
      %vm1016 = vcmp.eq.s32.totalorder %v890, 1
      %vm1017 = vcmp.eq.s32.totalorder %v893, 1
      %vm1018 = vcmp.eq.s32.totalorder %v896, 1
      %vm1019 = vcmp.eq.s32.totalorder %v899, 1
      %vm1020 = vcmp.eq.s32.totalorder %v902, 1
      %vm1021 = vcmp.eq.s32.totalorder %v905, 1
      %vm1022 = vcmp.eq.s32.totalorder %v908, 1
      %vm1023 = vcmp.eq.s32.totalorder %v911, 1
      %vm1024 = vcmp.eq.s32.totalorder %v914, 1
      %vm1025 = vcmp.eq.s32.totalorder %v917, 1
      %vm1026 = vcmp.eq.s32.totalorder %v920, 1
      %vm1027 = vcmp.eq.s32.totalorder %v923, 1
      %vm1028 = vcmp.eq.s32.totalorder %v926, 1
      %vm1029 = vcmp.eq.s32.totalorder %v929, 1
      %vm1030 = vcmp.eq.s32.totalorder %v932, 1
      %vm1031 = vcmp.eq.s32.totalorder %v935, 1
      %vm1032 = vcmp.eq.s32.totalorder %v938, 1
      %vm1033 = vcmp.eq.s32.totalorder %v941, 1
      %vm1034 = vcmp.eq.s32.totalorder %v944, 1
      %vm1035 = vcmp.eq.s32.totalorder %v947, 1
      %vm1036 = vcmp.eq.s32.totalorder %v950, 1
      %vm1037 = vcmp.eq.s32.totalorder %v953, 1
      %vm1038 = vcmp.eq.s32.totalorder %v956, 1
      %vm1039 = vcmp.eq.s32.totalorder %v959, 1
      %vm1040 = vcmp.eq.s32.totalorder %v962, 1
      %vm1041 = vcmp.eq.s32.totalorder %v965, 1
      %vm1042 = vcmp.eq.s32.totalorder %v968, 1
      %vm1043 = vcmp.eq.s32.totalorder %v971, 1
      %vm1044 = vcmp.eq.s32.totalorder %v974, 1
      %vm1045 = vcmp.eq.s32.totalorder %v977, 1
      %vm1046 = vcmp.eq.s32.totalorder %v980, 1
      %vm1047 = vcmp.eq.s32.totalorder %v983, 1
      %v1048 = vsel %vm984, %v282, 0.0
      %v1049 = vsel %vm985, %v287, 0.0
      %v1050 = vsel %vm986, %v292, 0.0
      %v1051 = vsel %vm987, %v297, 0.0
      %v1052 = vsel %vm988, %v302, 0.0
      %v1053 = vsel %vm989, %v307, 0.0
      %v1054 = vsel %vm990, %v312, 0.0
      %v1055 = vsel %vm991, %v317, 0.0
      %v1056 = vsel %vm992, %v322, 0.0
      %v1057 = vsel %vm993, %v327, 0.0
      %v1058 = vsel %vm994, %v332, 0.0
      %v1059 = vsel %vm995, %v337, 0.0
      %v1060 = vsel %vm996, %v342, 0.0
      %v1061 = vsel %vm997, %v347, 0.0
      %v1062 = vsel %vm998, %v352, 0.0
      %v1063 = vsel %vm999, %v357, 0.0
      %v1064 = vsel %vm1000, %v362, 0.0
      %v1065 = vsel %vm1001, %v367, 0.0
      %v1066 = vsel %vm1002, %v372, 0.0
      %v1067 = vsel %vm1003, %v377, 0.0
      %v1068 = vsel %vm1004, %v382, 0.0
      %v1069 = vsel %vm1005, %v387, 0.0
      %v1070 = vsel %vm1006, %v392, 0.0
      %v1071 = vsel %vm1007, %v397, 0.0
      %v1072 = vsel %vm1008, %v402, 0.0
      %v1073 = vsel %vm1009, %v407, 0.0
      %v1074 = vsel %vm1010, %v412, 0.0
      %v1075 = vsel %vm1011, %v417, 0.0
      %v1076 = vsel %vm1012, %v422, 0.0
      %v1077 = vsel %vm1013, %v427, 0.0
      %v1078 = vsel %vm1014, %v432, 0.0
      %v1079 = vsel %vm1015, %v437, 0.0
      %v1080 = vsel %vm1016, %v442, 0.0
      %v1081 = vsel %vm1017, %v447, 0.0
      %v1082 = vsel %vm1018, %v452, 0.0
      %v1083 = vsel %vm1019, %v457, 0.0
      %v1084 = vsel %vm1020, %v462, 0.0
      %v1085 = vsel %vm1021, %v467, 0.0
      %v1086 = vsel %vm1022, %v472, 0.0
      %v1087 = vsel %vm1023, %v477, 0.0
      %v1088 = vsel %vm1024, %v482, 0.0
      %v1089 = vsel %vm1025, %v487, 0.0
      %v1090 = vsel %vm1026, %v492, 0.0
      %v1091 = vsel %vm1027, %v497, 0.0
      %v1092 = vsel %vm1028, %v502, 0.0
      %v1093 = vsel %vm1029, %v507, 0.0
      %v1094 = vsel %vm1030, %v512, 0.0
      %v1095 = vsel %vm1031, %v517, 0.0
      %v1096 = vsel %vm1032, %v522, 0.0
      %v1097 = vsel %vm1033, %v527, 0.0
      %v1098 = vsel %vm1034, %v532, 0.0
      %v1099 = vsel %vm1035, %v537, 0.0
      %v1100 = vsel %vm1036, %v542, 0.0
      %v1101 = vsel %vm1037, %v547, 0.0
      %v1102 = vsel %vm1038, %v552, 0.0
      %v1103 = vsel %vm1039, %v557, 0.0
      %v1104 = vsel %vm1040, %v562, 0.0
      %v1105 = vsel %vm1041, %v567, 0.0
      %v1106 = vsel %vm1042, %v572, 0.0
      %v1107 = vsel %vm1043, %v577, 0.0
      %v1108 = vsel %vm1044, %v582, 0.0
      %v1109 = vsel %vm1045, %v587, 0.0
      %v1110 = vsel %vm1046, %v592, 0.0
      %v1111 = vsel %vm1047, %v597, 0.0
      %1112 = vst [vmem:[#allocation8] sm:$0xff] %v1048
      %1113 = vst [vmem:[#allocation8 + $0x8] sm:$0xff] %v1049
      %1114 = vst [vmem:[#allocation8 + $0x10] sm:$0xff] %v1050
      %1115 = vst [vmem:[#allocation8 + $0x18] sm:$0xff] %v1051
      %1116 = vst [vmem:[#allocation8 + $0x20] sm:$0xff] %v1052
      %1117 = vst [vmem:[#allocation8 + $0x28] sm:$0xff] %v1053
      %1118 = vst [vmem:[#allocation8 + $0x30] sm:$0xff] %v1054
      %1119 = vst [vmem:[#allocation8 + $0x38] sm:$0xff] %v1055
      %1120 = vst [vmem:[#allocation8 + $0x40] sm:$0xff] %v1056
      %1121 = vst [vmem:[#allocation8 + $0x48] sm:$0xff] %v1057
      %1122 = vst [vmem:[#allocation8 + $0x50] sm:$0xff] %v1058
      %1123 = vst [vmem:[#allocation8 + $0x58] sm:$0xff] %v1059
      %1124 = vst [vmem:[#allocation8 + $0x60] sm:$0xff] %v1060
      %1125 = vst [vmem:[#allocation8 + $0x68] sm:$0xff] %v1061
      %1126 = vst [vmem:[#allocation8 + $0x70] sm:$0xff] %v1062
      %1127 = vst [vmem:[#allocation8 + $0x78] sm:$0xff] %v1063
      %1128 = vst [vmem:[#allocation8 + $0x80] sm:$0xff] %v1064
      %1129 = vst [vmem:[#allocation8 + $0x88] sm:$0xff] %v1065
      %1130 = vst [vmem:[#allocation8 + $0x90] sm:$0xff] %v1066
      %1131 = vst [vmem:[#allocation8 + $0x98] sm:$0xff] %v1067
      %1132 = vst [vmem:[#allocation8 + $0xa0] sm:$0xff] %v1068
      %1133 = vst [vmem:[#allocation8 + $0xa8] sm:$0xff] %v1069
      %1134 = vst [vmem:[#allocation8 + $0xb0] sm:$0xff] %v1070
      %1135 = vst [vmem:[#allocation8 + $0xb8] sm:$0xff] %v1071
      %1136 = vst [vmem:[#allocation8 + $0xc0] sm:$0xff] %v1072
      %1137 = vst [vmem:[#allocation8 + $0xc8] sm:$0xff] %v1073
      %1138 = vst [vmem:[#allocation8 + $0xd0] sm:$0xff] %v1074
      %1139 = vst [vmem:[#allocation8 + $0xd8] sm:$0xff] %v1075
      %1140 = vst [vmem:[#allocation8 + $0xe0] sm:$0xff] %v1076
      %1141 = vst [vmem:[#allocation8 + $0xe8] sm:$0xff] %v1077
      %1142 = vst [vmem:[#allocation8 + $0xf0] sm:$0xff] %v1078
      %1143 = vst [vmem:[#allocation8 + $0xf8] sm:$0xff] %v1079
      %1144 = vst [vmem:[#allocation8 + $0x100] sm:$0xff] %v1080
      %1145 = vst [vmem:[#allocation8 + $0x108] sm:$0xff] %v1081
      %1146 = vst [vmem:[#allocation8 + $0x110] sm:$0xff] %v1082
      %1147 = vst [vmem:[#allocation8 + $0x118] sm:$0xff] %v1083
      %1148 = vst [vmem:[#allocation8 + $0x120] sm:$0xff] %v1084
      %1149 = vst [vmem:[#allocation8 + $0x128] sm:$0xff] %v1085
      %1150 = vst [vmem:[#allocation8 + $0x130] sm:$0xff] %v1086
      %1151 = vst [vmem:[#allocation8 + $0x138] sm:$0xff] %v1087
      %1152 = vst [vmem:[#allocation8 + $0x140] sm:$0xff] %v1088
      %1153 = vst [vmem:[#allocation8 + $0x148] sm:$0xff] %v1089
      %1154 = vst [vmem:[#allocation8 + $0x150] sm:$0xff] %v1090
      %1155 = vst [vmem:[#allocation8 + $0x158] sm:$0xff] %v1091
      %1156 = vst [vmem:[#allocation8 + $0x160] sm:$0xff] %v1092
      %1157 = vst [vmem:[#allocation8 + $0x168] sm:$0xff] %v1093
      %1158 = vst [vmem:[#allocation8 + $0x170] sm:$0xff] %v1094
      %1159 = vst [vmem:[#allocation8 + $0x178] sm:$0xff] %v1095
      %1160 = vst [vmem:[#allocation8 + $0x180] sm:$0xff] %v1096
      %1161 = vst [vmem:[#allocation8 + $0x188] sm:$0xff] %v1097
      %1162 = vst [vmem:[#allocation8 + $0x190] sm:$0xff] %v1098
      %1163 = vst [vmem:[#allocation8 + $0x198] sm:$0xff] %v1099
      %1164 = vst [vmem:[#allocation8 + $0x1a0] sm:$0xff] %v1100
      %1165 = vst [vmem:[#allocation8 + $0x1a8] sm:$0xff] %v1101
      %1166 = vst [vmem:[#allocation8 + $0x1b0] sm:$0xff] %v1102
      %1167 = vst [vmem:[#allocation8 + $0x1b8] sm:$0xff] %v1103
      %1168 = vst [vmem:[#allocation8 + $0x1c0] sm:$0xff] %v1104
      %1169 = vst [vmem:[#allocation8 + $0x1c8] sm:$0xff] %v1105
      %1170 = vst [vmem:[#allocation8 + $0x1d0] sm:$0xff] %v1106
      %1171 = vst [vmem:[#allocation8 + $0x1d8] sm:$0xff] %v1107
      %1172 = vst [vmem:[#allocation8 + $0x1e0] sm:$0xff] %v1108
      %1173 = vst [vmem:[#allocation8 + $0x1e8] sm:$0xff] %v1109
      %1174 = vst [vmem:[#allocation8 + $0x1f0] sm:$0xff] %v1110
      %1175 = vst [vmem:[#allocation8 + $0x1f8] sm:$0xff] %v1111
    $region25: #{tpu_custom_call.1} parent=1 // pred_fallthru
      _
    %s1176 = sld [smem:[#allocation3]]
    %p1177 = scmp.eq.s32.totalorder %s1176, 0
    // Predicated region
    $region26: #{tpu_custom_call.1} parent=1 // pred_check
      %p1178 = pneg %p1177
    $region27: #{tpu_custom_call.1} parent=1 // pred_check_branch
      %1180 = sbr.rel (%p1178) target = $region29
    $region28: #{tpu_custom_call.1} parent=1 // pred_region
      %1181 = vst [vmem:[#allocation8] sm:$0xff] 0.0
      %1182 = vst [vmem:[#allocation8 + $0x8] sm:$0xff] 0.0
      %1183 = vst [vmem:[#allocation8 + $0x10] sm:$0xff] 0.0
      %1184 = vst [vmem:[#allocation8 + $0x18] sm:$0xff] 0.0
      %1185 = vst [vmem:[#allocation8 + $0x20] sm:$0xff] 0.0
      %1186 = vst [vmem:[#allocation8 + $0x28] sm:$0xff] 0.0
      %1187 = vst [vmem:[#allocation8 + $0x30] sm:$0xff] 0.0
      %1188 = vst [vmem:[#allocation8 + $0x38] sm:$0xff] 0.0
      %1189 = vst [vmem:[#allocation8 + $0x40] sm:$0xff] 0.0
      %1190 = vst [vmem:[#allocation8 + $0x48] sm:$0xff] 0.0
      %1191 = vst [vmem:[#allocation8 + $0x50] sm:$0xff] 0.0
      %1192 = vst [vmem:[#allocation8 + $0x58] sm:$0xff] 0.0
      %1193 = vst [vmem:[#allocation8 + $0x60] sm:$0xff] 0.0
      %1194 = vst [vmem:[#allocation8 + $0x68] sm:$0xff] 0.0
      %1195 = vst [vmem:[#allocation8 + $0x70] sm:$0xff] 0.0
      %1196 = vst [vmem:[#allocation8 + $0x78] sm:$0xff] 0.0
      %1197 = vst [vmem:[#allocation8 + $0x80] sm:$0xff] 0.0
      %1198 = vst [vmem:[#allocation8 + $0x88] sm:$0xff] 0.0
      %1199 = vst [vmem:[#allocation8 + $0x90] sm:$0xff] 0.0
      %1200 = vst [vmem:[#allocation8 + $0x98] sm:$0xff] 0.0
      %1201 = vst [vmem:[#allocation8 + $0xa0] sm:$0xff] 0.0
      %1202 = vst [vmem:[#allocation8 + $0xa8] sm:$0xff] 0.0
      %1203 = vst [vmem:[#allocation8 + $0xb0] sm:$0xff] 0.0
      %1204 = vst [vmem:[#allocation8 + $0xb8] sm:$0xff] 0.0
      %1205 = vst [vmem:[#allocation8 + $0xc0] sm:$0xff] 0.0
      %1206 = vst [vmem:[#allocation8 + $0xc8] sm:$0xff] 0.0
      %1207 = vst [vmem:[#allocation8 + $0xd0] sm:$0xff] 0.0
      %1208 = vst [vmem:[#allocation8 + $0xd8] sm:$0xff] 0.0
      %1209 = vst [vmem:[#allocation8 + $0xe0] sm:$0xff] 0.0
      %1210 = vst [vmem:[#allocation8 + $0xe8] sm:$0xff] 0.0
      %1211 = vst [vmem:[#allocation8 + $0xf0] sm:$0xff] 0.0
      %1212 = vst [vmem:[#allocation8 + $0xf8] sm:$0xff] 0.0
      %1213 = vst [vmem:[#allocation8 + $0x100] sm:$0xff] 0.0
      %1214 = vst [vmem:[#allocation8 + $0x108] sm:$0xff] 0.0
      %1215 = vst [vmem:[#allocation8 + $0x110] sm:$0xff] 0.0
      %1216 = vst [vmem:[#allocation8 + $0x118] sm:$0xff] 0.0
      %1217 = vst [vmem:[#allocation8 + $0x120] sm:$0xff] 0.0
      %1218 = vst [vmem:[#allocation8 + $0x128] sm:$0xff] 0.0
      %1219 = vst [vmem:[#allocation8 + $0x130] sm:$0xff] 0.0
      %1220 = vst [vmem:[#allocation8 + $0x138] sm:$0xff] 0.0
      %1221 = vst [vmem:[#allocation8 + $0x140] sm:$0xff] 0.0
      %1222 = vst [vmem:[#allocation8 + $0x148] sm:$0xff] 0.0
      %1223 = vst [vmem:[#allocation8 + $0x150] sm:$0xff] 0.0
      %1224 = vst [vmem:[#allocation8 + $0x158] sm:$0xff] 0.0
      %1225 = vst [vmem:[#allocation8 + $0x160] sm:$0xff] 0.0
      %1226 = vst [vmem:[#allocation8 + $0x168] sm:$0xff] 0.0
      %1227 = vst [vmem:[#allocation8 + $0x170] sm:$0xff] 0.0
      %1228 = vst [vmem:[#allocation8 + $0x178] sm:$0xff] 0.0
      %1229 = vst [vmem:[#allocation8 + $0x180] sm:$0xff] 0.0
      %1230 = vst [vmem:[#allocation8 + $0x188] sm:$0xff] 0.0
      %1231 = vst [vmem:[#allocation8 + $0x190] sm:$0xff] 0.0
      %1232 = vst [vmem:[#allocation8 + $0x198] sm:$0xff] 0.0
      %1233 = vst [vmem:[#allocation8 + $0x1a0] sm:$0xff] 0.0
      %1234 = vst [vmem:[#allocation8 + $0x1a8] sm:$0xff] 0.0
      %1235 = vst [vmem:[#allocation8 + $0x1b0] sm:$0xff] 0.0
      %1236 = vst [vmem:[#allocation8 + $0x1b8] sm:$0xff] 0.0
      %1237 = vst [vmem:[#allocation8 + $0x1c0] sm:$0xff] 0.0
      %1238 = vst [vmem:[#allocation8 + $0x1c8] sm:$0xff] 0.0
      %1239 = vst [vmem:[#allocation8 + $0x1d0] sm:$0xff] 0.0
      %1240 = vst [vmem:[#allocation8 + $0x1d8] sm:$0xff] 0.0
      %1241 = vst [vmem:[#allocation8 + $0x1e0] sm:$0xff] 0.0
      %1242 = vst [vmem:[#allocation8 + $0x1e8] sm:$0xff] 0.0
      %1243 = vst [vmem:[#allocation8 + $0x1f0] sm:$0xff] 0.0
      %1244 = vst [vmem:[#allocation8 + $0x1f8] sm:$0xff] 0.0
    $region29: #{tpu_custom_call.1} parent=1 // pred_fallthru
      _
    // Predicated region
    $region30: #{tpu_custom_call.1} parent=1 // pred_check
      _
    $region31: #{tpu_custom_call.1} parent=1 // pred_check_branch
      %1246 = sbr.rel (0) target = $region33
    $region32: #{tpu_custom_call.1} parent=1 // pred_region
      %s1248 = ssub.s32 8192, 8192
      %1249 = vsyncadd [#allocation7], %s1248
      %s1250 = sshll.u32 [#allocation8], 4
      %s1251 = int_to_ptr.vmem [resolvable:$true] %s1250
      %1256 = dma.vmem_to_hbm [thread:$0]  %s1251, 8192, %s6, [#allocation7], 128, 128, 8
    $region33: #{tpu_custom_call.1} parent=1 // pred_fallthru
      _
    // Predicated region
    $region34: #{tpu_custom_call.1} parent=1 // pred_check
      _
    $region35: #{tpu_custom_call.1} parent=1 // pred_check_branch
      %1258 = sbr.rel (0) target = $region37
    $region36: #{tpu_custom_call.1} parent=1 // pred_region
      %1259 = dma.done [#allocation7], 8192
    $region37: #{tpu_custom_call.1} parent=1 // pred_fallthru
      _
    %1260 = vsyncpa [#allocation6], 1
    %1261 = vsyncpa [#allocation7], 1

</llo_original>
